<compile_context>
chip_gen: v6e
topology: v6e:2x2x1
jax: 0.10.0
libtpu: 0.0.40
codegen_flags: <defaults>
</compile_context>

<pallas_src>
import functools

import jax
import jax.numpy as jnp
import numpy as np
from jax.experimental import pallas as pl
from jax.experimental.pallas import tpu as pltpu

_EPS = 1e-5                      # PyTorch GroupNorm default eps
_VMEM_LIMIT = 32 * 1024 * 1024   # well under v7x's 64 MiB physical VMEM


def _round_up(x, m):
    return (x + m - 1) // m * m


# ---------------------------------------------------------------------------
# Fused per-stage kernel (one grid step per sample):
#   sub-pixel ConvTranspose2d(k3, s2, p1) as ONE wide-K MXU matmul
#   + masked two-pass GroupNorm(1) statistics
#   + normalize + affine (+ SiLU)
# ---------------------------------------------------------------------------
def _stage_kernel(p_ref, wt_ref, rc_ref, g_ref, b_ref, o_ref, *,
                  Co, H, W, apply_silu):
    """One sample.

    p_ref:  (1, 4*Ci, Mpad)  2x2-im2col'd input, channel-major, lane-dense
    wt_ref: (4*Co, 4*Ci)     packed tap matrix
    rc_ref: (2, Mpad) int32  [row, col] of each lane's input pixel (row==H -> pad)
    g_ref:  (4*Co, 1) f32    gamma tiled over the 4 parity classes
    b_ref:  (4*Co, 1) f32    beta  tiled over the 4 parity classes
    o_ref:  (1, 4*Co, Mpad)  normalized (+SiLU) output, parity-class packed, f32
    """
    # single wide-K MXU matmul (all 9 taps fused; f32 accumulation)
    y = jnp.dot(wt_ref[...], p_ref[0], preferred_element_type=jnp.float32)

    # validity mask — packed channel order along sublanes is [ee, eo, oe, oo]xCo.
    # eo needs col < W-1, oe needs row < H-1, oo needs both; padded lanes have
    # row == H so they always fail (row < H).
    C4 = y.shape[0]
    r = rc_ref[0:1, :]                                      # (1, Mpad)
    c = rc_ref[1:2, :]
    sub = jax.lax.broadcasted_iota(jnp.int32, (C4, 1), 0)   # packed channel idx
    odd_col = ((sub >= Co) & (sub < 2 * Co)) | (sub >= 3 * Co)
    odd_row = sub >= 2 * Co
    valid = (r < H)
    valid = valid & (jnp.logical_not(odd_col) | (c < W - 1))
    valid = valid & (jnp.logical_not(odd_row) | (r < H - 1))
    vf = valid.astype(jnp.float32)

    # two-pass GroupNorm(1) statistics over the valid output elements only
    cnt = float((2 * H - 1) * (2 * W - 1) * Co)
    mean = jnp.sum(y * vf) * (1.0 / cnt)
    diff = (y - mean) * vf
    var = jnp.sum(diff * diff) * (1.0 / cnt)

    # rsqrt on a small (C4, 1) vector (EUP), then fused affine
    inv = jax.lax.rsqrt(jnp.broadcast_to(var, (C4, 1)).astype(jnp.float32) + _EPS)
    scale = g_ref[...] * inv                    # (C4, 1)
    shift = b_ref[...] - mean * scale           # (C4, 1)
    yn = y * scale + shift                      # (C4, Mpad)
    if apply_silu:
        yn = yn * jax.nn.sigmoid(yn)
    o_ref[0] = yn


# ---------------------------------------------------------------------------
# One stage: ConvTranspose2d(k3,s2,p1,no-bias) + GroupNorm(1, Co) [+ SiLU]
# ---------------------------------------------------------------------------
def _ct_gn_stage(x_nchw, w, gamma, beta, *, apply_silu, compute_dtype):
    """x_nchw: (N, Ci, H, W) f32; w: (Ci, Co, 3, 3) PyTorch ConvTranspose2d layout.
    Returns (N, Co, 2H-1, 2W-1) f32."""
    N, Ci, H, W = x_nchw.shape
    Co = w.shape[1]
    Ho, Wo = 2 * H - 1, 2 * W - 1
    M = H * W
    Mpad = _round_up(M, 128)
    K4, C4 = 4 * Ci, 4 * Co

    # --- glue: channel-major 2x2 im2col of the ORIGINAL input (no transposes:
    #     NCHW is already channel-major; only pads/slices/concat on tiny data).
    xp = jnp.pad(x_nchw, ((0, 0), (0, 0), (0, 1), (0, 1)))
    parts = [x_nchw,                        # A = x[r,   c]
             xp[:, :, :H, 1:W + 1],         # B = x[r,   c+1]
             xp[:, :, 1:H + 1, :W],         # C = x[r+1, c]
             xp[:, :, 1:H + 1, 1:W + 1]]    # D = x[r+1, c+1]
    P = jnp.concatenate(parts, axis=1).reshape(N, K4, M)
    P = jnp.pad(P, ((0, 0), (0, 0), (0, Mpad - M))).astype(compute_dtype)

    # --- glue: packed tap matrix.  Output parity classes [ee, eo, oe, oo]:
    #   ee = A@w11 ; eo = A@w12 + B@w10 ; oe = A@w21 + C@w01
    #   oo = A@w22 + B@w20 + C@w02 + D@w00     (w_kykx = w[:, :, ky, kx])
    wf = w.astype(jnp.float32)
    Z = jnp.zeros((Ci, Co), jnp.float32)
    Wb = jnp.block([
        [wf[:, :, 1, 1], wf[:, :, 1, 2], wf[:, :, 2, 1], wf[:, :, 2, 2]],
        [Z,              wf[:, :, 1, 0], Z,              wf[:, :, 2, 0]],
        [Z,              Z,              wf[:, :, 0, 1], wf[:, :, 0, 2]],
        [Z,              Z,              Z,              wf[:, :, 0, 0]],
    ])                                             # (4Ci, 4Co)
    Wt = jnp.transpose(Wb).astype(compute_dtype)   # (4Co, 4Ci)

    # --- glue: per-lane (row, col) of the input pixel; row==H marks padded lanes
    m_idx = np.arange(Mpad)
    rows = np.where(m_idx < M, m_idx // W, H).astype(np.int32)
    cols = np.where(m_idx < M, m_idx % W, W).astype(np.int32)
    rc = jnp.asarray(np.stack([rows, cols], axis=0))          # (2, Mpad) int32

    # GroupNorm affine params, tiled over the 4 parity classes (f32)
    gamma4 = jnp.tile(gamma.astype(jnp.float32), 4).reshape(C4, 1)
    beta4 = jnp.tile(beta.astype(jnp.float32), 4).reshape(C4, 1)

    kernel = functools.partial(_stage_kernel, Co=Co, H=H, W=W,
                               apply_silu=apply_silu)
    y_packed = pl.pallas_call(
        kernel,
        out_shape=jax.ShapeDtypeStruct((N, C4, Mpad), jnp.float32),
        grid_spec=pltpu.PrefetchScalarGridSpec(
            num_scalar_prefetch=0,
            grid=(N,),
            in_specs=[
                pl.BlockSpec((1, K4, Mpad), lambda n: (n, 0, 0)),
                pl.BlockSpec((C4, K4), lambda n: (0, 0)),
                pl.BlockSpec((2, Mpad), lambda n: (0, 0)),
                pl.BlockSpec((C4, 1), lambda n: (0, 0)),
                pl.BlockSpec((C4, 1), lambda n: (0, 0)),
            ],
            out_specs=pl.BlockSpec((1, C4, Mpad), lambda n: (n, 0, 0)),
        ),
        compiler_params=pltpu.CompilerParams(
            dimension_semantics=("parallel",),
            vmem_limit_bytes=_VMEM_LIMIT),
    )(P, Wt, rc, gamma4, beta4)

    # --- glue: parity un-interleave straight to NCHW (no NHWC intermediate)
    yc = y_packed[:, :, :M].reshape(N, 2, 2, Co, H, W)    # (N, rp, cp, Co, H, W)
    yc = jnp.transpose(yc, (0, 3, 4, 1, 5, 2))            # (N, Co, H, rp, W, cp)
    full = yc.reshape(N, Co, 2 * H, 2 * W)
    return full[:, :, :Ho, :Wo]                           # drop out-of-range row/col


def transposed_double_conv(x_nchw, params, residual=False,
                           compute_dtype=jnp.bfloat16):
    """Forward pass of TransposedDoubleConv.  x_nchw: (N, Cin, H, W) f32."""
    w1, g1, b1, w2, g2, b2 = params
    x = x_nchw.astype(jnp.float32)
    h = _ct_gn_stage(x, w1, g1, b1, apply_silu=True, compute_dtype=compute_dtype)
    y = _ct_gn_stage(h, w2, g2, b2, apply_silu=False, compute_dtype=compute_dtype)
    if residual:
        # TODO(synk): residual=True requires x and double_conv(x) to have equal
        # shapes, which is impossible with stride-2 transposed convs; only the
        # residual=False path (module default) is exercised.
        return jax.nn.gelu(x_nchw + y, approximate=False)
    return y


# ----------------------- pure-JAX reference (for checking) -----------------------
def _reference(x_nchw, params):
    w1, g1, b1, w2, g2, b2 = params

    def ct_gn(x, w, g, b, silu):
        wflip = jnp.transpose(w[:, :, ::-1, ::-1], (2, 3, 0, 1))  # HWIO
        y = jax.lax.conv_general_dilated(
            x, wflip, window_strides=(1, 1), padding=((1, 1), (1, 1)),
            lhs_dilation=(2, 2), rhs_dilation=(1, 1),
            dimension_numbers=("NHWC", "HWIO", "NHWC"))
        mean = jnp.mean(y, axis=(1, 2, 3), keepdims=True)
        var = jnp.mean((y - mean) ** 2, axis=(1, 2, 3), keepdims=True)
        y = (y - mean) * jax.lax.rsqrt(var + _EPS)
        y = y * g[None, None, None, :] + b[None, None, None, :]
        if silu:
            y = y * jax.nn.sigmoid(y)
        return y

    x = jnp.transpose(x_nchw, (0, 2, 3, 1)).astype(jnp.float32)
    h = ct_gn(x, w1, g1, b1, True)
    y = ct_gn(h, w2, g2, b2, False)
    return jnp.transpose(y, (0, 3, 1, 2))


def init_params(key, in_channels, out_channels, mid_channels=None):
    if not mid_channels:
        mid_channels = out_channels
    k1, k2, k3, k4, k5, k6 = jax.random.split(key, 6)
    # ConvTranspose2d weight layout: (Cin, Cout, kH, kW), bias=False
    w1 = 0.2 * jax.random.normal(k1, (in_channels, mid_channels, 3, 3), jnp.float32)
    w2 = 0.2 * jax.random.normal(k2, (mid_channels, out_channels, 3, 3), jnp.float32)
    # GroupNorm affine params (perturbed so the affine path is exercised)
    g1 = 1.0 + 0.1 * jax.random.normal(k3, (mid_channels,), jnp.float32)
    b1 = 0.1 * jax.random.normal(k4, (mid_channels,), jnp.float32)
    g2 = 1.0 + 0.1 * jax.random.normal(k5, (out_channels,), jnp.float32)
    b2 = 0.1 * jax.random.normal(k6, (out_channels,), jnp.float32)
    return w1, g1, b1, w2, g2, b2


if __name__ == "__main__":
    key = jax.random.PRNGKey(0)
    kx, kp = jax.random.split(key)

    N, C_IN, H, W = 2, 4, 16, 16
    C_OUT = 8
    x = jax.random.normal(kx, (N, C_IN, H, W), jnp.float32)
    params = init_params(kp, C_IN, C_OUT)

    y_ref = jax.block_until_ready(_reference(x, params))
    out_shape = (N, C_OUT, 2 * (2 * H - 1) - 1, 2 * (2 * W - 1) - 1)

    # f32 path: strict parity with the f32 reference
    fwd_f32 = jax.jit(functools.partial(transposed_double_conv, residual=False,
                                        compute_dtype=jnp.float32))
    y32 = jax.block_until_ready(fwd_f32(x, params))
    assert y32.shape == out_shape, y32.shape
    np.testing.assert_allclose(np.asarray(y32), np.asarray(y_ref),
                               rtol=2e-4, atol=2e-4)

    # bf16 matmul-input path (perf config for v6e/v7x; f32 accumulation/stats):
    # looser tolerance per the review.
    fwd_bf16 = jax.jit(functools.partial(transposed_double_conv, residual=False,
                                         compute_dtype=jnp.bfloat16))
    y16 = jax.block_until_ready(fwd_bf16(x, params))
    assert y16.shape == out_shape, y16.shape
    np.testing.assert_allclose(np.asarray(y16), np.asarray(y_ref),
                               rtol=1e-1, atol=1e-1)

    print("KERNEL_OK")
</pallas_src>

<mosaic_0001>
module attributes {stable_mosaic.version = 11 : i64} {
  func.func @_stage_kernel(%arg0: i32, %arg1: memref<1x16x256xf32, #tpu.memory_space<vmem>>, %arg2: memref<32x16xf32, #tpu.memory_space<vmem>>, %arg3: memref<2x256xi32, #tpu.memory_space<vmem>>, %arg4: memref<32x1xf32, #tpu.memory_space<vmem>>, %arg5: memref<32x1xf32, #tpu.memory_space<vmem>>, %arg6: memref<1x32x256xf32, #tpu.memory_space<vmem>>) attributes {dimension_semantics = [#tpu.dimension_semantics<parallel>], iteration_bounds = array<i64: 2>, scalar_prefetch = 0 : i64, scratch_operands = 0 : i64, tpu.core_type = #tpu.core_type<tc>, window_params = [{transform_indices = @transform_0, window_bounds = array<i64: 1, 16, 256>}, {pipeline_mode = #tpu.pipeline_mode<synchronous>, transform_indices = @transform_1, window_bounds = array<i64: 32, 16>}, {pipeline_mode = #tpu.pipeline_mode<synchronous>, transform_indices = @transform_2, window_bounds = array<i64: 2, 256>}, {pipeline_mode = #tpu.pipeline_mode<synchronous>, transform_indices = @transform_3, window_bounds = array<i64: 32, 1>}, {pipeline_mode = #tpu.pipeline_mode<synchronous>, transform_indices = @transform_4, window_bounds = array<i64: 32, 1>}, {transform_indices = @transform_5, window_bounds = array<i64: 1, 32, 256>}]} {
    %c0 = arith.constant 0 : index
    %c0_0 = arith.constant 0 : index
    %0 = vector.load %arg2[%c0, %c0_0] : memref<32x16xf32, #tpu.memory_space<vmem>>, vector<32x16xf32>
    %c0_1 = arith.constant 0 : index
    %c0_2 = arith.constant 0 : index
    %c0_3 = arith.constant 0 : index
    %1 = vector.load %arg1[%c0_1, %c0_2, %c0_3] : memref<1x16x256xf32, #tpu.memory_space<vmem>>, vector<1x16x256xf32>
    %2 = vector.shape_cast %1 : vector<1x16x256xf32> to vector<16x256xf32>
    %cst = arith.constant dense<0.000000e+00> : vector<32x256xf32>
    %3 = tpu.matmul %0, %2, %cst {dimension_numbers = #tpu.dot_dimension_numbers<[1], [0], [0], [1], [0, 0, 1, 1], [], []>} : vector<32x16xf32>, vector<16x256xf32>, vector<32x256xf32> -> vector<32x256xf32>
    %c0_4 = arith.constant 0 : index
    %c0_5 = arith.constant 0 : index
    %4 = vector.load %arg3[%c0_4, %c0_5] : memref<2x256xi32, #tpu.memory_space<vmem>>, vector<1x256xi32>
    %c1 = arith.constant 1 : index
    %c0_6 = arith.constant 0 : index
    %5 = vector.load %arg3[%c1, %c0_6] : memref<2x256xi32, #tpu.memory_space<vmem>>, vector<1x256xi32>
    %6 = tpu.iota {dimensions = array<i32: 0>} : vector<32x1xi32>
    %c8_i32 = arith.constant 8 : i32
    %7 = vector.broadcast %c8_i32 : i32 to vector<32x1xi32>
    %8 = arith.cmpi sge, %6, %7 : vector<32x1xi32>
    %c16_i32 = arith.constant 16 : i32
    %9 = vector.broadcast %c16_i32 : i32 to vector<32x1xi32>
    %10 = arith.cmpi slt, %6, %9 : vector<32x1xi32>
    %11 = arith.andi %8, %10 : vector<32x1xi1>
    %c24_i32 = arith.constant 24 : i32
    %12 = vector.broadcast %c24_i32 : i32 to vector<32x1xi32>
    %13 = arith.cmpi sge, %6, %12 : vector<32x1xi32>
    %14 = arith.ori %11, %13 : vector<32x1xi1>
    %c16_i32_7 = arith.constant 16 : i32
    %15 = vector.broadcast %c16_i32_7 : i32 to vector<32x1xi32>
    %16 = arith.cmpi sge, %6, %15 : vector<32x1xi32>
    %c16_i32_8 = arith.constant 16 : i32
    %17 = vector.broadcast %c16_i32_8 : i32 to vector<1x256xi32>
    %18 = arith.cmpi slt, %4, %17 : vector<1x256xi32>
    %cst_9 = arith.constant dense<true> : vector<32x1xi1>
    %19 = arith.xori %14, %cst_9 : vector<32x1xi1>
    %c15_i32 = arith.constant 15 : i32
    %20 = vector.broadcast %c15_i32 : i32 to vector<1x256xi32>
    %21 = arith.cmpi slt, %5, %20 : vector<1x256xi32>
    %22 = vector.broadcast %19 : vector<32x1xi1> to vector<32x256xi1>
    %23 = vector.broadcast %21 : vector<1x256xi1> to vector<32x256xi1>
    %24 = arith.ori %22, %23 : vector<32x256xi1>
    %25 = vector.broadcast %18 : vector<1x256xi1> to vector<32x256xi1>
    %26 = arith.andi %25, %24 : vector<32x256xi1>
    %cst_10 = arith.constant dense<true> : vector<32x1xi1>
    %27 = arith.xori %16, %cst_10 : vector<32x1xi1>
    %c15_i32_11 = arith.constant 15 : i32
    %28 = vector.broadcast %c15_i32_11 : i32 to vector<1x256xi32>
    %29 = arith.cmpi slt, %4, %28 : vector<1x256xi32>
    %30 = vector.broadcast %27 : vector<32x1xi1> to vector<32x256xi1>
    %31 = vector.broadcast %29 : vector<1x256xi1> to vector<32x256xi1>
    %32 = arith.ori %30, %31 : vector<32x256xi1>
    %33 = arith.andi %26, %32 : vector<32x256xi1>
    %34 = arith.extui %33 : vector<32x256xi1> to vector<32x256xi32>
    %35 = arith.sitofp %34 : vector<32x256xi32> to vector<32x256xf32>
    %36 = arith.mulf %3, %35 : vector<32x256xf32>
    %37 = vector.shape_cast %36 : vector<32x256xf32> to vector<1x32x256xf32>
    %cst_12 = arith.constant dense<0.000000e+00> : vector<1xf32>
    %38 = vector.multi_reduction <add>, %37, %cst_12 [1, 2] : vector<1x32x256xf32> to vector<1xf32>
    %39 = vector.shape_cast %38 : vector<1xf32> to vector<1x1x1xf32>
    %40 = vector.extract %39[0, 0, 0] : f32 from vector<1x1x1xf32>
    %cst_13 = arith.constant 1.30072847E-4 : f32
    %41 = arith.mulf %40, %cst_13 : f32
    %42 = vector.broadcast %41 : f32 to vector<32x256xf32>
    %43 = arith.subf %3, %42 : vector<32x256xf32>
    %44 = arith.mulf %43, %35 : vector<32x256xf32>
    %45 = arith.mulf %44, %44 : vector<32x256xf32>
    %46 = vector.shape_cast %45 : vector<32x256xf32> to vector<1x32x256xf32>
    %cst_14 = arith.constant dense<0.000000e+00> : vector<1xf32>
    %47 = vector.multi_reduction <add>, %46, %cst_14 [1, 2] : vector<1x32x256xf32> to vector<1xf32>
    %48 = vector.shape_cast %47 : vector<1xf32> to vector<1x1x1xf32>
    %49 = vector.extract %48[0, 0, 0] : f32 from vector<1x1x1xf32>
    %cst_15 = arith.constant 1.30072847E-4 : f32
    %50 = arith.mulf %49, %cst_15 : f32
    %51 = vector.broadcast %50 : f32 to vector<32x1xf32>
    %cst_16 = arith.constant 9.99999974E-6 : f32
    %52 = vector.broadcast %cst_16 : f32 to vector<32x1xf32>
    %53 = arith.addf %51, %52 : vector<32x1xf32>
    %54 = math.rsqrt %53 : vector<32x1xf32>
    %c0_17 = arith.constant 0 : index
    %c0_18 = arith.constant 0 : index
    %55 = vector.load %arg4[%c0_17, %c0_18] : memref<32x1xf32, #tpu.memory_space<vmem>>, vector<32x1xf32>
    %56 = arith.mulf %55, %54 : vector<32x1xf32>
    %c0_19 = arith.constant 0 : index
    %c0_20 = arith.constant 0 : index
    %57 = vector.load %arg5[%c0_19, %c0_20] : memref<32x1xf32, #tpu.memory_space<vmem>>, vector<32x1xf32>
    %58 = vector.broadcast %41 : f32 to vector<32x1xf32>
    %59 = arith.mulf %58, %56 : vector<32x1xf32>
    %60 = arith.subf %57, %59 : vector<32x1xf32>
    %61 = vector.broadcast %56 : vector<32x1xf32> to vector<32x256xf32>
    %62 = arith.mulf %3, %61 : vector<32x256xf32>
    %63 = vector.broadcast %60 : vector<32x1xf32> to vector<32x256xf32>
    %64 = arith.addf %62, %63 : vector<32x256xf32>
    %65 = arith.negf %64 : vector<32x256xf32>
    %66 = math.exp %65 : vector<32x256xf32>
    %cst_21 = arith.constant 1.000000e+00 : f32
    %67 = vector.broadcast %cst_21 : f32 to vector<32x256xf32>
    %68 = arith.addf %67, %66 : vector<32x256xf32>
    %69 = arith.divf %67, %68 : vector<32x256xf32>
    %70 = arith.mulf %64, %69 : vector<32x256xf32>
    %c0_22 = arith.constant 0 : index
    %c0_23 = arith.constant 0 : index
    %c0_24 = arith.constant 0 : index
    %71 = vector.load %arg6[%c0_22, %c0_23, %c0_24] : memref<1x32x256xf32, #tpu.memory_space<vmem>>, vector<1x32x256xf32>
    %72 = vector.shape_cast %71 : vector<1x32x256xf32> to vector<32x256xf32>
    %73 = vector.shape_cast %70 : vector<32x256xf32> to vector<1x32x256xf32>
    tpu.vector_store %arg6[%c0_22, %c0_23, %c0_24], %73 {strides = array<i32>} : memref<1x32x256xf32, #tpu.memory_space<vmem>>, vector<1x32x256xf32>,
    return
  }
  func.func @transform_0(%arg0: i32) -> (i32, i32, i32) {
    %c0_i32 = arith.constant 0 : i32
    %c0_i32_0 = arith.constant 0 : i32
    %c0_i32_1 = arith.constant 0 : i32
    return %arg0, %c0_i32, %c0_i32_0 : i32, i32, i32
  }
  func.func @transform_1(%arg0: i32) -> (i32, i32) {
    %c0_i32 = arith.constant 0 : i32
    %c0_i32_0 = arith.constant 0 : i32
    %c0_i32_1 = arith.constant 0 : i32
    return %c0_i32, %c0_i32_0 : i32, i32
  }
  func.func @transform_2(%arg0: i32) -> (i32, i32) {
    %c0_i32 = arith.constant 0 : i32
    %c0_i32_0 = arith.constant 0 : i32
    %c0_i32_1 = arith.constant 0 : i32
    return %c0_i32, %c0_i32_0 : i32, i32
  }
  func.func @transform_3(%arg0: i32) -> (i32, i32) {
    %c0_i32 = arith.constant 0 : i32
    %c0_i32_0 = arith.constant 0 : i32
    %c0_i32_1 = arith.constant 0 : i32
    return %c0_i32, %c0_i32_0 : i32, i32
  }
  func.func @transform_4(%arg0: i32) -> (i32, i32) {
    %c0_i32 = arith.constant 0 : i32
    %c0_i32_0 = arith.constant 0 : i32
    %c0_i32_1 = arith.constant 0 : i32
    return %c0_i32, %c0_i32_0 : i32, i32
  }
  func.func @transform_5(%arg0: i32) -> (i32, i32, i32) {
    %c0_i32 = arith.constant 0 : i32
    %c0_i32_0 = arith.constant 0 : i32
    %c0_i32_1 = arith.constant 0 : i32
    return %arg0, %c0_i32, %c0_i32_0 : i32, i32, i32
  }
}

module attributes {stable_mosaic.version = 11 : i64} {
  func.func @_stage_kernel(%arg0: i32, %arg1: memref<1x32x1024xf32, #tpu.memory_space<vmem>>, %arg2: memref<32x32xf32, #tpu.memory_space<vmem>>, %arg3: memref<2x1024xi32, #tpu.memory_space<vmem>>, %arg4: memref<32x1xf32, #tpu.memory_space<vmem>>, %arg5: memref<32x1xf32, #tpu.memory_space<vmem>>, %arg6: memref<1x32x1024xf32, #tpu.memory_space<vmem>>) attributes {dimension_semantics = [#tpu.dimension_semantics<parallel>], iteration_bounds = array<i64: 2>, scalar_prefetch = 0 : i64, scratch_operands = 0 : i64, tpu.core_type = #tpu.core_type<tc>, window_params = [{transform_indices = @transform_0, window_bounds = array<i64: 1, 32, 1024>}, {pipeline_mode = #tpu.pipeline_mode<synchronous>, transform_indices = @transform_1, window_bounds = array<i64: 32, 32>}, {pipeline_mode = #tpu.pipeline_mode<synchronous>, transform_indices = @transform_2, window_bounds = array<i64: 2, 1024>}, {pipeline_mode = #tpu.pipeline_mode<synchronous>, transform_indices = @transform_3, window_bounds = array<i64: 32, 1>}, {pipeline_mode = #tpu.pipeline_mode<synchronous>, transform_indices = @transform_4, window_bounds = array<i64: 32, 1>}, {transform_indices = @transform_5, window_bounds = array<i64: 1, 32, 1024>}]} {
    %c0 = arith.constant 0 : index
    %c0_0 = arith.constant 0 : index
    %0 = vector.load %arg2[%c0, %c0_0] : memref<32x32xf32, #tpu.memory_space<vmem>>, vector<32x32xf32>
    %c0_1 = arith.constant 0 : index
    %c0_2 = arith.constant 0 : index
    %c0_3 = arith.constant 0 : index
    %1 = vector.load %arg1[%c0_1, %c0_2, %c0_3] : memref<1x32x1024xf32, #tpu.memory_space<vmem>>, vector<1x32x1024xf32>
    %2 = vector.shape_cast %1 : vector<1x32x1024xf32> to vector<32x1024xf32>
    %cst = arith.constant dense<0.000000e+00> : vector<32x1024xf32>
    %3 = tpu.matmul %0, %2, %cst {dimension_numbers = #tpu.dot_dimension_numbers<[1], [0], [0], [1], [0, 0, 1, 1], [], []>} : vector<32x32xf32>, vector<32x1024xf32>, vector<32x1024xf32> -> vector<32x1024xf32>
    %c0_4 = arith.constant 0 : index
    %c0_5 = arith.constant 0 : index
    %4 = vector.load %arg3[%c0_4, %c0_5] : memref<2x1024xi32, #tpu.memory_space<vmem>>, vector<1x1024xi32>
    %c1 = arith.constant 1 : index
    %c0_6 = arith.constant 0 : index
    %5 = vector.load %arg3[%c1, %c0_6] : memref<2x1024xi32, #tpu.memory_space<vmem>>, vector<1x1024xi32>
    %6 = tpu.iota {dimensions = array<i32: 0>} : vector<32x1xi32>
    %c8_i32 = arith.constant 8 : i32
    %7 = vector.broadcast %c8_i32 : i32 to vector<32x1xi32>
    %8 = arith.cmpi sge, %6, %7 : vector<32x1xi32>
    %c16_i32 = arith.constant 16 : i32
    %9 = vector.broadcast %c16_i32 : i32 to vector<32x1xi32>
    %10 = arith.cmpi slt, %6, %9 : vector<32x1xi32>
    %11 = arith.andi %8, %10 : vector<32x1xi1>
    %c24_i32 = arith.constant 24 : i32
    %12 = vector.broadcast %c24_i32 : i32 to vector<32x1xi32>
    %13 = arith.cmpi sge, %6, %12 : vector<32x1xi32>
    %14 = arith.ori %11, %13 : vector<32x1xi1>
    %c16_i32_7 = arith.constant 16 : i32
    %15 = vector.broadcast %c16_i32_7 : i32 to vector<32x1xi32>
    %16 = arith.cmpi sge, %6, %15 : vector<32x1xi32>
    %c31_i32 = arith.constant 31 : i32
    %17 = vector.broadcast %c31_i32 : i32 to vector<1x1024xi32>
    %18 = arith.cmpi slt, %4, %17 : vector<1x1024xi32>
    %cst_8 = arith.constant dense<true> : vector<32x1xi1>
    %19 = arith.xori %14, %cst_8 : vector<32x1xi1>
    %c30_i32 = arith.constant 30 : i32
    %20 = vector.broadcast %c30_i32 : i32 to vector<1x1024xi32>
    %21 = arith.cmpi slt, %5, %20 : vector<1x1024xi32>
    %22 = vector.broadcast %19 : vector<32x1xi1> to vector<32x1024xi1>
    %23 = vector.broadcast %21 : vector<1x1024xi1> to vector<32x1024xi1>
    %24 = arith.ori %22, %23 : vector<32x1024xi1>
    %25 = vector.broadcast %18 : vector<1x1024xi1> to vector<32x1024xi1>
    %26 = arith.andi %25, %24 : vector<32x1024xi1>
    %cst_9 = arith.constant dense<true> : vector<32x1xi1>
    %27 = arith.xori %16, %cst_9 : vector<32x1xi1>
    %c30_i32_10 = arith.constant 30 : i32
    %28 = vector.broadcast %c30_i32_10 : i32 to vector<1x1024xi32>
    %29 = arith.cmpi slt, %4, %28 : vector<1x1024xi32>
    %30 = vector.broadcast %27 : vector<32x1xi1> to vector<32x1024xi1>
    %31 = vector.broadcast %29 : vector<1x1024xi1> to vector<32x1024xi1>
    %32 = arith.ori %30, %31 : vector<32x1024xi1>
    %33 = arith.andi %26, %32 : vector<32x1024xi1>
    %34 = arith.extui %33 : vector<32x1024xi1> to vector<32x1024xi32>
    %35 = arith.sitofp %34 : vector<32x1024xi32> to vector<32x1024xf32>
    %36 = arith.mulf %3, %35 : vector<32x1024xf32>
    %37 = vector.shape_cast %36 : vector<32x1024xf32> to vector<1x32x1024xf32>
    %cst_11 = arith.constant dense<0.000000e+00> : vector<1xf32>
    %38 = vector.multi_reduction <add>, %37, %cst_11 [1, 2] : vector<1x32x1024xf32> to vector<1xf32>
    %39 = vector.shape_cast %38 : vector<1xf32> to vector<1x1x1xf32>
    %40 = vector.extract %39[0, 0, 0] : f32 from vector<1x1x1xf32>
    %cst_12 = arith.constant 3.35931218E-5 : f32
    %41 = arith.mulf %40, %cst_12 : f32
    %42 = vector.broadcast %41 : f32 to vector<32x1024xf32>
    %43 = arith.subf %3, %42 : vector<32x1024xf32>
    %44 = arith.mulf %43, %35 : vector<32x1024xf32>
    %45 = arith.mulf %44, %44 : vector<32x1024xf32>
    %46 = vector.shape_cast %45 : vector<32x1024xf32> to vector<1x32x1024xf32>
    %cst_13 = arith.constant dense<0.000000e+00> : vector<1xf32>
    %47 = vector.multi_reduction <add>, %46, %cst_13 [1, 2] : vector<1x32x1024xf32> to vector<1xf32>
    %48 = vector.shape_cast %47 : vector<1xf32> to vector<1x1x1xf32>
    %49 = vector.extract %48[0, 0, 0] : f32 from vector<1x1x1xf32>
    %cst_14 = arith.constant 3.35931218E-5 : f32
    %50 = arith.mulf %49, %cst_14 : f32
    %51 = vector.broadcast %50 : f32 to vector<32x1xf32>
    %cst_15 = arith.constant 9.99999974E-6 : f32
    %52 = vector.broadcast %cst_15 : f32 to vector<32x1xf32>
    %53 = arith.addf %51, %52 : vector<32x1xf32>
    %54 = math.rsqrt %53 : vector<32x1xf32>
    %c0_16 = arith.constant 0 : index
    %c0_17 = arith.constant 0 : index
    %55 = vector.load %arg4[%c0_16, %c0_17] : memref<32x1xf32, #tpu.memory_space<vmem>>, vector<32x1xf32>
    %56 = arith.mulf %55, %54 : vector<32x1xf32>
    %c0_18 = arith.constant 0 : index
    %c0_19 = arith.constant 0 : index
    %57 = vector.load %arg5[%c0_18, %c0_19] : memref<32x1xf32, #tpu.memory_space<vmem>>, vector<32x1xf32>
    %58 = vector.broadcast %41 : f32 to vector<32x1xf32>
    %59 = arith.mulf %58, %56 : vector<32x1xf32>
    %60 = arith.subf %57, %59 : vector<32x1xf32>
    %61 = vector.broadcast %56 : vector<32x1xf32> to vector<32x1024xf32>
    %62 = arith.mulf %3, %61 : vector<32x1024xf32>
    %63 = vector.broadcast %60 : vector<32x1xf32> to vector<32x1024xf32>
    %64 = arith.addf %62, %63 : vector<32x1024xf32>
    %c0_20 = arith.constant 0 : index
    %c0_21 = arith.constant 0 : index
    %c0_22 = arith.constant 0 : index
    %65 = vector.load %arg6[%c0_20, %c0_21, %c0_22] : memref<1x32x1024xf32, #tpu.memory_space<vmem>>, vector<1x32x1024xf32>
    %66 = vector.shape_cast %65 : vector<1x32x1024xf32> to vector<32x1024xf32>
    %67 = vector.shape_cast %64 : vector<32x1024xf32> to vector<1x32x1024xf32>
    tpu.vector_store %arg6[%c0_20, %c0_21, %c0_22], %67 {strides = array<i32>} : memref<1x32x1024xf32, #tpu.memory_space<vmem>>, vector<1x32x1024xf32>,
    return
  }
  func.func @transform_0(%arg0: i32) -> (i32, i32, i32) {
    %c0_i32 = arith.constant 0 : i32
    %c0_i32_0 = arith.constant 0 : i32
    %c0_i32_1 = arith.constant 0 : i32
    return %arg0, %c0_i32, %c0_i32_0 : i32, i32, i32
  }
  func.func @transform_1(%arg0: i32) -> (i32, i32) {
    %c0_i32 = arith.constant 0 : i32
    %c0_i32_0 = arith.constant 0 : i32
    %c0_i32_1 = arith.constant 0 : i32
    return %c0_i32, %c0_i32_0 : i32, i32
  }
  func.func @transform_2(%arg0: i32) -> (i32, i32) {
    %c0_i32 = arith.constant 0 : i32
    %c0_i32_0 = arith.constant 0 : i32
    %c0_i32_1 = arith.constant 0 : i32
    return %c0_i32, %c0_i32_0 : i32, i32
  }
  func.func @transform_3(%arg0: i32) -> (i32, i32) {
    %c0_i32 = arith.constant 0 : i32
    %c0_i32_0 = arith.constant 0 : i32
    %c0_i32_1 = arith.constant 0 : i32
    return %c0_i32, %c0_i32_0 : i32, i32
  }
  func.func @transform_4(%arg0: i32) -> (i32, i32) {
    %c0_i32 = arith.constant 0 : i32
    %c0_i32_0 = arith.constant 0 : i32
    %c0_i32_1 = arith.constant 0 : i32
    return %c0_i32, %c0_i32_0 : i32, i32
  }
  func.func @transform_5(%arg0: i32) -> (i32, i32, i32) {
    %c0_i32 = arith.constant 0 : i32
    %c0_i32_0 = arith.constant 0 : i32
    %c0_i32_1 = arith.constant 0 : i32
    return %arg0, %c0_i32, %c0_i32_0 : i32, i32, i32
  }
}

</mosaic_0001>

<llo_original>
// kernel: tile.23
$region0: #{tile.23}
  #allocation2 [shape = 's32[1]{0}', space=sflag, size = 0x4, scoped, tag = 'scoped memory for tile.23']
  %s0 = inlined_call_operand.hbm [shape: f32[8], index: 0, kind: input, shape index: {}]
  %s1 = inlined_call_operand.vmem [shape: f32[4,8], index: 1, kind: output, shape index: {}]
  $region1: #{tile.23} parent=0
    #allocation0 [shape = 'u8[512]{0}', space=vmem, size = 0x400, scoped, tag = 'operand span for operand 0']
    #allocation1 [shape = 's32[1]{0}', space=sflag, size = 0x4, scoped, tag = 'scoped memory for tile.23']
    %2 = vsyncpa [#allocation1], 0
    // Predicated region
    $region2: #{tile.23} parent=1 // pred_check
      _
    $region3: #{tile.23} parent=1 // pred_check_branch
      %4 = sbr.rel (0) target = $region5
    $region4: #{tile.23} parent=1 // pred_region
      %s6 = ssub.s32 16, 16
      %7 = vsyncadd [#allocation1], %s6
      %s9 = sshll.u32 [#allocation0], 4
      %s10 = int_to_ptr.vmem [resolvable:$true] %s9
      %12 = dma.hbm_to_vmem [thread:$0]  %s0, 16, %s10, [#allocation1]
    $region5: #{tile.23} parent=1 // pred_fallthru
      _
    // Predicated region
    $region6: #{tile.23} parent=1 // pred_check
      _
    $region7: #{tile.23} parent=1 // pred_check_branch
      %14 = sbr.rel (0) target = $region9
    $region8: #{tile.23} parent=1 // pred_region
      %15 = dma.done [#allocation1], 16
    $region9: #{tile.23} parent=1 // pred_fallthru
      _
    %v16 = vld [vmem:[#allocation0] ss:$0 sm:$0xff]
    %17 = vst [vmem:[%s1] sm:$0xf] %v16
    %18 = vsyncpa [#allocation1], 1

// kernel: tile.3
$region0: #{tile.3}
  %s0 = inlined_call_operand.vmem [shape: f32[4,8], index: 0, kind: input, shape index: {}]
  %s1 = inlined_call_operand.vmem [shape: f32[32,1], index: 1, kind: output, shape index: {}]
  $region1: #{tile.3} parent=0
    #allocation0 [shape = 'u8[4096]{0}', space=vmem, size = 0x1000, scoped, tag = 'scoped mem for input reshape']
    %s3 = sshll.u32 1, 4
    %s4 = ssub.s32 %s3, 1
    %v5 = vld [vmem:[%s0] sm:%s4]
    %6 = vst [vmem:[#allocation0] sm:%s4] %v5
    %v7 = vld [vmem:[#allocation0] sm:$0xf]
    %vm8 = vcmask 7168
    %9 = vst.msk [vmem:[%s1] ss:$8 sm:$0xf] %vm8, %v7
    %v10 = vld [vmem:[#allocation0] sm:$0xf]
    %11 = vrot.lane.b32.xlu0 %v10, 127
    %v12 = vpop.permute.xlu0 %11
    %vm13 = vcmask 7168
    %s14 = scalar_lea.vmem %s1, 1
    %15 = vst.msk [vmem:[%s14] ss:$8 sm:$0xf] %vm13, %v12
    %v16 = vld [vmem:[#allocation0] sm:$0xf]
    %17 = vrot.lane.b32.xlu0 %v16, 126
    %v18 = vpop.permute.xlu0 %17
    %vm19 = vcmask 7168
    %s20 = scalar_lea.vmem %s1, 2
    %21 = vst.msk [vmem:[%s20] ss:$8 sm:$0xf] %vm19, %v18
    %v22 = vld [vmem:[#allocation0] sm:$0xf]
    %23 = vrot.lane.b32.xlu0 %v22, 125
    %v24 = vpop.permute.xlu0 %23
    %vm25 = vcmask 7168
    %s26 = scalar_lea.vmem %s1, 3
    %27 = vst.msk [vmem:[%s26] ss:$8 sm:$0xf] %vm25, %v24
    %v28 = vld [vmem:[#allocation0] sm:$0xf]
    %29 = vrot.lane.b32.xlu0 %v28, 124
    %v30 = vpop.permute.xlu0 %29
    %vm31 = vcmask 7168
    %s32 = scalar_lea.vmem %s1, 4
    %33 = vst.msk [vmem:[%s32] ss:$8 sm:$0xf] %vm31, %v30
    %v34 = vld [vmem:[#allocation0] sm:$0xf]
    %35 = vrot.lane.b32.xlu0 %v34, 123
    %v36 = vpop.permute.xlu0 %35
    %vm37 = vcmask 7168
    %s38 = scalar_lea.vmem %s1, 5
    %39 = vst.msk [vmem:[%s38] ss:$8 sm:$0xf] %vm37, %v36
    %v40 = vld [vmem:[#allocation0] sm:$0xf]
    %41 = vrot.lane.b32.xlu0 %v40, 122
    %v42 = vpop.permute.xlu0 %41
    %vm43 = vcmask 7168
    %s44 = scalar_lea.vmem %s1, 6
    %45 = vst.msk [vmem:[%s44] ss:$8 sm:$0xf] %vm43, %v42
    %v46 = vld [vmem:[#allocation0] sm:$0xf]
    %47 = vrot.lane.b32.xlu0 %v46, 121
    %v48 = vpop.permute.xlu0 %47
    %vm49 = vcmask 7168
    %s50 = scalar_lea.vmem %s1, 7
    %51 = vst.msk [vmem:[%s50] ss:$8 sm:$0xf] %vm49, %v48

// kernel: transposed_double_conv.2
$region0: #{transposed_double_conv.2}
  #allocation0 [shape = 'u32[]', space=smem, size = 0x4, offset = 0x4, fixed_abs, tag = 'smem constant byte address 0x4 - core index']
  #allocation1 [shape = 'u32[144,128]{1,0:T(1,128)}', space=vmem, size = 0x12000, scoped, tag = 'internal scratch']
  %s0 = inlined_call_operand.vmem [shape: f32[2,16,256], index: 0, kind: input, shape index: {}]
  %s1 = inlined_call_operand.vmem [shape: f32[32,16], index: 1, kind: input, shape index: {}]
  %s2 = inlined_call_operand.hbm [shape: s32[2,256], index: 2, kind: input, shape index: {}]
  %s3 = inlined_call_operand.vmem [shape: f32[32,1], index: 3, kind: input, shape index: {}]
  %s4 = inlined_call_operand.vmem [shape: f32[32,1], index: 4, kind: input, shape index: {}]
  %s5 = inlined_call_operand.vmem [shape: f32[2,32,256], index: 5, kind: output, shape index: {}]
  %s6 = sld [smem:[#allocation0]]
  $region57: #{transposed_double_conv.2} parent=0
    _
  %s8 = ssub.s32 1, %s6
  %s9 = scalar_select 0, %s8, %s6
  $region1: #{transposed_double_conv.2} parent=0
    #allocation2 [shape = 'u8[2048]{0}', space=vmem, size = 0x800, scoped, tag = 'input window, operand 2, single buffered']
    #allocation3 [shape = 's32[2]{0}', space=sflag, size = 0x8, scoped, tag = 'scoped memory for transposed_double_conv.2']
    %10 = vsyncpa [#allocation3], 0
    loop: start=0, step=1, limit=4
    $region2: #{transposed_double_conv.2} parent=1 // loop_pre_header
      _
    $region3: #{transposed_double_conv.2} parent=1 // loop_header
      %s12 = sphi 0, %s16
      %p13 = scmp.ge.s32.totalorder %s12, 4
      %s22 = sphi 0, %s24
      %s25 = sphi 0, %s22
      %s26 = sphi 0, %s25
      %s42 = sphi 0, %s26
      %s46 = sphi 0, %s46
      %s48 = sphi 0, %s46
      %s49 = sphi 0, %s48
      %s63 = sphi 0, %s49
      %s67 = sphi 0, %s67
      %s69 = sphi 0, %s67
      %s70 = sphi 0, %s69
      %s84 = sphi 0, %s70
      %s88 = sphi 0, %s88
      %s90 = sphi 0, %s88
      %s91 = sphi 0, %s90
      %s105 = sphi 0, %s91
      %s109 = sphi 0, %s109
      %s111 = sphi 0, %s109
      %s112 = sphi 0, %s111
      %s126 = sphi 0, %s112
      %s132 = sphi 0, %s134
      %s135 = sphi 0, %s132
      %s136 = sphi 0, %s135
      %s152 = sphi 0, %s136
    $region4: #{transposed_double_conv.2} parent=1 // loop_header_branch
      %15 = sbr.rel (%p13) target = $region8
    $region5: #{transposed_double_conv.2} parent=1 // loop_body
      %s17 = ssub.s32 %s12, 1
      %s18 = ssub.s32 %s12, 2
      %s19 = sadd.s32 %s12, 1
      %s20 = ssub.s32 %s12, %s19
      %p21 = scmp.eq.s32.totalorder %s20, 0
      %s23 = sadd.s32 %s22, 1
      %s24 = scalar_select %p21, %s22, %s23
      %p27 = pneg %p21
      %p28 = scmp.eq.s32.totalorder %s12, 1
      %p29 = por %p27, %p28
      %p30 = scmp.ne.s32.totalorder %s22, %s25
      %p31 = scmp.eq.s32.totalorder %s12, 0
      %p32 = por %p30, %p31
      %p33 = scmp.ne.s32.totalorder %s22, %s25
      %p34 = scmp.eq.s32.totalorder %s17, 1
      %p35 = por %p33, %p34
      %p36 = scmp.ne.s32.totalorder %s25, %s26
      %p37 = scmp.eq.s32.totalorder %s17, 0
      %p38 = por %p36, %p37
      %p39 = scmp.ne.s32.totalorder %s25, %s26
      %p40 = scmp.eq.s32.totalorder %s18, 1
      %p41 = por %p39, %p40
      %p43 = scmp.ne.s32.totalorder %s26, %s42
      %p44 = scmp.eq.s32.totalorder %s18, 0
      %p45 = por %p43, %p44
      %s47 = sadd.s32 %s46, 1
      %p50 = scmp.eq.s32.totalorder %s12, 1
      %p51 = scmp.ne.s32.totalorder %s46, %s48
      %p52 = scmp.eq.s32.totalorder %s12, 0
      %p53 = por %p51, %p52
      %p54 = scmp.ne.s32.totalorder %s46, %s48
      %p55 = scmp.eq.s32.totalorder %s17, 1
      %p56 = por %p54, %p55
      %p57 = scmp.ne.s32.totalorder %s48, %s49
      %p58 = scmp.eq.s32.totalorder %s17, 0
      %p59 = por %p57, %p58
      %p60 = scmp.ne.s32.totalorder %s48, %s49
      %p61 = scmp.eq.s32.totalorder %s18, 1
      %p62 = por %p60, %p61
      %p64 = scmp.ne.s32.totalorder %s49, %s63
      %p65 = scmp.eq.s32.totalorder %s18, 0
      %p66 = por %p64, %p65
      %s68 = sadd.s32 %s67, 1
      %p71 = scmp.eq.s32.totalorder %s12, 1
      %p72 = scmp.ne.s32.totalorder %s67, %s69
      %p73 = scmp.eq.s32.totalorder %s12, 0
      %p74 = por %p72, %p73
      %p75 = scmp.ne.s32.totalorder %s67, %s69
      %p76 = scmp.eq.s32.totalorder %s17, 1
      %p77 = por %p75, %p76
      %p78 = scmp.ne.s32.totalorder %s69, %s70
      %p79 = scmp.eq.s32.totalorder %s17, 0
      %p80 = por %p78, %p79
      %p81 = scmp.ne.s32.totalorder %s69, %s70
      %p82 = scmp.eq.s32.totalorder %s18, 1
      %p83 = por %p81, %p82
      %p85 = scmp.ne.s32.totalorder %s70, %s84
      %p86 = scmp.eq.s32.totalorder %s18, 0
      %p87 = por %p85, %p86
      %s89 = sadd.s32 %s88, 1
      %p92 = scmp.eq.s32.totalorder %s12, 1
      %p93 = scmp.ne.s32.totalorder %s88, %s90
      %p94 = scmp.eq.s32.totalorder %s12, 0
      %p95 = por %p93, %p94
      %p96 = scmp.ne.s32.totalorder %s88, %s90
      %p97 = scmp.eq.s32.totalorder %s17, 1
      %p98 = por %p96, %p97
      %p99 = scmp.ne.s32.totalorder %s90, %s91
      %p100 = scmp.eq.s32.totalorder %s17, 0
      %p101 = por %p99, %p100
      %p102 = scmp.ne.s32.totalorder %s90, %s91
      %p103 = scmp.eq.s32.totalorder %s18, 1
      %p104 = por %p102, %p103
      %p106 = scmp.ne.s32.totalorder %s91, %s105
      %p107 = scmp.eq.s32.totalorder %s18, 0
      %p108 = por %p106, %p107
      %s110 = sadd.s32 %s109, 1
      %p113 = scmp.eq.s32.totalorder %s12, 1
      %p114 = scmp.ne.s32.totalorder %s109, %s111
      %p115 = scmp.eq.s32.totalorder %s12, 0
      %p116 = por %p114, %p115
      %p117 = scmp.ne.s32.totalorder %s109, %s111
      %p118 = scmp.eq.s32.totalorder %s17, 1
      %p119 = por %p117, %p118
      %p120 = scmp.ne.s32.totalorder %s111, %s112
      %p121 = scmp.eq.s32.totalorder %s17, 0
      %p122 = por %p120, %p121
      %p123 = scmp.ne.s32.totalorder %s111, %s112
      %p124 = scmp.eq.s32.totalorder %s18, 1
      %p125 = por %p123, %p124
      %p127 = scmp.ne.s32.totalorder %s112, %s126
      %p128 = scmp.eq.s32.totalorder %s18, 0
      %p129 = por %p127, %p128
      %s130 = ssub.s32 %s12, %s19
      %p131 = scmp.eq.s32.totalorder %s130, 0
      %s133 = sadd.s32 %s132, 1
      %s134 = scalar_select %p131, %s132, %s133
      %p137 = pneg %p131
      %p138 = scmp.eq.s32.totalorder %s12, 1
      %p139 = por %p137, %p138
      %p140 = scmp.ne.s32.totalorder %s132, %s135
      %p141 = scmp.eq.s32.totalorder %s12, 0
      %p142 = por %p140, %p141
      %p143 = scmp.ne.s32.totalorder %s132, %s135
      %p144 = scmp.eq.s32.totalorder %s17, 1
      %p145 = por %p143, %p144
      %p146 = scmp.ne.s32.totalorder %s135, %s136
      %p147 = scmp.eq.s32.totalorder %s17, 0
      %p148 = por %p146, %p147
      %p149 = scmp.ne.s32.totalorder %s135, %s136
      %p150 = scmp.eq.s32.totalorder %s18, 1
      %p151 = por %p149, %p150
      %p153 = scmp.ne.s32.totalorder %s136, %s152
      %p154 = scmp.eq.s32.totalorder %s18, 0
      %p155 = por %p153, %p154
      %p156 = scmp.le.s32.totalorder 1, %s12
      %p157 = scmp.lt.s32.totalorder %s12, 3
      %p158 = pnand %p156, %p157
      %p159 = pneg %p158
      // Predicated region
      $region9: #{transposed_double_conv.2} parent=5 // pred_check
        _
      $region10: #{transposed_double_conv.2} parent=5 // pred_check_branch
        %161 = sbr.rel (%p158) target = $region12
      $region11: #{transposed_double_conv.2} parent=5 // pred_region
        %s162 = ssub.s32 %s12, 1
        // Predicated region
        $region13: #{transposed_double_conv.2} parent=11 // pred_check
          %p163 = pneg %p59
        $region14: #{transposed_double_conv.2} parent=11 // pred_check_branch
          %165 = sbr.rel (%p163) target = $region16
        $region15: #{transposed_double_conv.2} parent=11 // pred_region
          _
        $region16: #{transposed_double_conv.2} parent=11 // pred_fallthru
          _
        // Predicated region
        $region17: #{transposed_double_conv.2} parent=11 // pred_check
          %p166 = pneg %p80
        $region18: #{transposed_double_conv.2} parent=11 // pred_check_branch
          %168 = sbr.rel (%p166) target = $region20
        $region19: #{transposed_double_conv.2} parent=11 // pred_region
          %s170 = ssub.s32 64, 64
          %171 = vsyncadd [#allocation3], %s170
          %s173 = sshll.u32 [#allocation2], 4
          %s174 = int_to_ptr.vmem [resolvable:$true] %s173
          %176 = dma.hbm_to_vmem [thread:$0]  %s2, 64, %s174, [#allocation3]
        $region20: #{transposed_double_conv.2} parent=11 // pred_fallthru
          _
        // Predicated region
        $region21: #{transposed_double_conv.2} parent=11 // pred_check
          %p177 = pneg %p101
        $region22: #{transposed_double_conv.2} parent=11 // pred_check_branch
          %179 = sbr.rel (%p177) target = $region24
        $region23: #{transposed_double_conv.2} parent=11 // pred_region
          _
        $region24: #{transposed_double_conv.2} parent=11 // pred_fallthru
          _
        // Predicated region
        $region25: #{transposed_double_conv.2} parent=11 // pred_check
          %p180 = pneg %p122
        $region26: #{transposed_double_conv.2} parent=11 // pred_check_branch
          %182 = sbr.rel (%p180) target = $region28
        $region27: #{transposed_double_conv.2} parent=11 // pred_region
          _
        $region28: #{transposed_double_conv.2} parent=11 // pred_fallthru
          _
      $region12: #{transposed_double_conv.2} parent=5 // pred_fallthru
        _
      %p183 = scmp.lt.s32.totalorder %s12, 2
      // Predicated region
      $region29: #{transposed_double_conv.2} parent=5 // pred_check
        %p184 = pneg %p183
      $region30: #{transposed_double_conv.2} parent=5 // pred_check_branch
        %186 = sbr.rel (%p184) target = $region32
      $region31: #{transposed_double_conv.2} parent=5 // pred_region
        // Predicated region
        $region33: #{transposed_double_conv.2} parent=31 // pred_check
          %p187 = pneg %p32
        $region34: #{transposed_double_conv.2} parent=31 // pred_check_branch
          %189 = sbr.rel (%p187) target = $region36
        $region35: #{transposed_double_conv.2} parent=31 // pred_region
          %p190 = scmp.lt.s32.totalorder %s12, 1
          %s191 = scalar_select %p190, %s12, 1
          %s192 = smul.addr %s191, 4
          %s193 = smul.addr %s192, 8
          %s194 = scalar_lea.vmem %s0, %s193
        $region36: #{transposed_double_conv.2} parent=31 // pred_fallthru
          _
      $region32: #{transposed_double_conv.2} parent=5 // pred_fallthru
        _
      %p195 = scmp.le.s32.totalorder 1, %s12
      %p196 = scmp.lt.s32.totalorder %s12, 3
      %p197 = pnand %p195, %p196
      %p198 = pneg %p197
      // Predicated region
      $region37: #{transposed_double_conv.2} parent=5 // pred_check
        _
      $region38: #{transposed_double_conv.2} parent=5 // pred_check_branch
        %200 = sbr.rel (%p197) target = $region40
      $region39: #{transposed_double_conv.2} parent=5 // pred_region
        %s201 = ssub.s32 %s12, 1
        // Predicated region
        $region41: #{transposed_double_conv.2} parent=39 // pred_check
          %p202 = pneg %p80
        $region42: #{transposed_double_conv.2} parent=39 // pred_check_branch
          %204 = sbr.rel (%p202) target = $region44
        $region43: #{transposed_double_conv.2} parent=39 // pred_region
          %205 = dma.done [#allocation3], 64
        $region44: #{transposed_double_conv.2} parent=39 // pred_fallthru
          _
        %p206 = scmp.lt.s32.totalorder %s17, 1
        %s207 = scalar_select %p206, %s17, 1
        %s208 = smul.addr %s207, 4
        %s209 = smul.addr %s208, 8
        %s210 = scalar_lea.vmem %s0, %s209
        %p211 = pneg %p38
        %p212 = pneg %p35
        %p213 = pneg %p59
        %p214 = pneg %p56
        %p215 = pneg %p80
        %p216 = pneg %p77
        %p217 = pneg %p101
        %p218 = pneg %p98
        %p219 = pneg %p122
        %p220 = pneg %p119
        %p221 = pneg %p148
        %p222 = pneg %p145
        %p223 = scmp.lt.s32.totalorder %s17, 1
        %s224 = scalar_select %p223, %s17, 1
        %s225 = smul.addr %s224, 8
        %s226 = smul.addr %s225, 8
        %s227 = scalar_lea.vmem %s5, %s226
        %p228 = scmp.lt.s32.totalorder %s17, 1
        %s229 = scalar_select %p228, %s17, 1
        %s230 = smul.addr %s229, 4
        %s231 = smul.addr %s230, 8
        %s232 = scalar_lea.vmem %s0, %s231
        %p233 = scmp.lt.s32.totalorder %s17, 1
        %s234 = scalar_select %p233, %s17, 1
        %s235 = smul.addr %s234, 8
        %s236 = smul.addr %s235, 8
        %s237 = scalar_lea.vmem %s5, %s236
        %v238 = vld [vmem:[%s1] sm:$0xff]
        %v239 = vld [vmem:[%s1 + $0x8] sm:$0xff]
        %v240 = vld [vmem:[%s1 + $0x10] sm:$0xff]
        %v241 = vld [vmem:[%s1 + $0x18] sm:$0xff]
        %v242 = vld [vmem:[%s232] sm:$0xff]
        %v243 = vld [vmem:[%s232 + $0x8] sm:$0xff]
        %v244 = vld [vmem:[%s232 + $0x10] sm:$0xff]
        %v245 = vld [vmem:[%s232 + $0x18] sm:$0xff]
        %vm246 = vcmask 130048
        %v248 = vsel %vm246, %v238, 0
        %v251 = vsel %vm246, %v239, 0
        %v254 = vsel %vm246, %v240, 0
        %v257 = vsel %vm246, %v241, 0
        %259 = vmatprep.subr.mxu0 0.0
        %260 = vmatpush1.msra.mxu0 0.0
        %261 = vmatprep.subr.mxu0 0.0
        %262 = vmatpush1.msra.mxu0 0.0
        %263 = vmatprep.subr.mxu0 0.0
        %264 = vmatpush1.msra.mxu0 0.0
        %265 = vmatprep.subr.mxu0 0.0
        %266 = vmatpush1.msra.mxu0 0.0
        %267 = vmatprep.subr.mxu0 0.0
        %268 = vmatpush1.msra.mxu0 0.0
        %269 = vmatprep.subr.mxu0 0.0
        %270 = vmatpush1.msra.mxu0 0.0
        %271 = vmatprep.subr.mxu0 0.0
        %272 = vmatpush1.msra.mxu0 0.0
        %273 = vmatprep.subr.mxu0 0.0
        %274 = vmatpush1.msra.mxu0 0.0
        %275 = vmatprep.subr.mxu0 0.0
        %276 = vmatpush1.msra.mxu0 0.0
        %277 = vmatprep.subr.mxu0 0.0
        %278 = vmatpush1.msra.mxu0 0.0
        %279 = vmatprep.subr.mxu0 0.0
        %280 = vmatpush1.msra.mxu0 0.0
        %281 = vmatprep.subr.mxu0 0.0
        %282 = vmatpush1.msra.mxu0 0.0
        %283 = vmatprep.subr.mxu0 0.0
        %284 = vmatpush1.msra.mxu0 0.0
        %285 = vmatprep.subr.mxu0 0.0
        %286 = vmatpush1.msra.mxu0 0.0
        %287 = vmatprep.subr.mxu0 %v245
        %288 = vmatpush1.msra.mxu0 %v244
        %289 = vmatprep.subr.mxu0 %v243
        %290 = vmatpush1.msra.mxu0 %v242
        %291 = vmatprep.subr.mxu0 0.0
        %292 = vmatpush2.msra.mxu0 0.0
        %293 = vmatprep.subr.mxu0 0.0
        %294 = vmatpush2.msra.mxu0 0.0
        %295 = vmatprep.subr.mxu0 0.0
        %296 = vmatpush2.msra.mxu0 0.0
        %297 = vmatprep.subr.mxu0 0.0
        %298 = vmatpush2.msra.mxu0 0.0
        %299 = vmatprep.subr.mxu0 0.0
        %300 = vmatpush2.msra.mxu0 0.0
        %301 = vmatprep.subr.mxu0 0.0
        %302 = vmatpush2.msra.mxu0 0.0
        %303 = vmatprep.subr.mxu0 0.0
        %304 = vmatpush2.msra.mxu0 0.0
        %305 = vmatprep.subr.mxu0 0.0
        %306 = vmatpush2.msra.mxu0 0.0
        %307 = vmatprep.subr.mxu0 0.0
        %308 = vmatpush2.msra.mxu0 0.0
        %309 = vmatprep.subr.mxu0 0.0
        %310 = vmatpush2.msra.mxu0 0.0
        %311 = vmatprep.subr.mxu0 0.0
        %312 = vmatpush2.msra.mxu0 0.0
        %313 = vmatprep.subr.mxu0 0.0
        %314 = vmatpush2.msra.mxu0 0.0
        %315 = vmatprep.subr.mxu0 0.0
        %316 = vmatpush2.msra.mxu0 0.0
        %317 = vmatprep.subr.mxu0 0.0
        %318 = vmatpush2.msra.mxu0 0.0
        %319 = vmatprep.subr.mxu0 0.0
        %320 = vmatpush2.msra.mxu0 0.0
        %321 = vmatprep.subr.mxu0 0.0
        %322 = vmatpush2.msra.mxu0 0.0
        %323 = vmatprep.mubr.f32.mxu0 0.0
        %324 = vmatmul.mubr.f32.gmra.mxu0 %v248
        %v325 = vpop.f32.mrf.mxu0
        %v326 = vadd.f32 0.0, %v325
        %v327 = vpop.f32.mrf.mxu0
        %v328 = vadd.f32 0.0, %v327
        %329 = vmatprep.mubr.f32.mxu0 0.0
        %330 = vmatmul.mubr.f32.gmra.mxu0 %v251
        %v331 = vpop.f32.mrf.mxu0
        %v332 = vadd.f32 0.0, %v331
        %v333 = vpop.f32.mrf.mxu0
        %v334 = vadd.f32 0.0, %v333
        %335 = vmatprep.mubr.f32.mxu0 0.0
        %336 = vmatmul.mubr.f32.gmra.mxu0 %v254
        %v337 = vpop.f32.mrf.mxu0
        %v338 = vadd.f32 0.0, %v337
        %v339 = vpop.f32.mrf.mxu0
        %v340 = vadd.f32 0.0, %v339
        %341 = vmatprep.mubr.f32.mxu0 0.0
        %342 = vmatmul.mubr.f32.gmra.mxu0 %v257
        %v343 = vpop.f32.mrf.mxu0
        %v344 = vadd.f32 0.0, %v343
        %v345 = vpop.f32.mrf.mxu0
        %v346 = vadd.f32 0.0, %v345
        %347 = vdwg.mxu0
        %v348 = vld [vmem:[#allocation2] ss:$2 sm:$0x3]
        %s349 = scalar_lea.vmem [#allocation2], 1
        %v350 = vld [vmem:[%s349] ss:$2 sm:$0x3]
        %v351 = vlaneseq
        %v352 = vshrl.u32 %v351, 7
        %v353 = vadd.s32 %v352, 8
        %v354 = vadd.s32 %v352, 16
        %v355 = vadd.s32 %v352, 24
        %vm356 = vcmp.ge.s32.totalorder %v352, 8
        %vm357 = vcmp.ge.s32.totalorder %v353, 8
        %vm358 = vcmp.ge.s32.totalorder %v354, 8
        %vm359 = vcmp.ge.s32.totalorder %v355, 8
        %vm360 = vcmp.lt.s32.totalorder %v352, 16
        %vm361 = vcmp.lt.s32.totalorder %v353, 16
        %vm362 = vcmp.lt.s32.totalorder %v354, 16
        %vm363 = vcmp.lt.s32.totalorder %v355, 16
        %vm364 = vmand %vm356, %vm360
        %vm365 = vmand %vm357, %vm361
        %vm366 = vmand %vm358, %vm362
        %vm367 = vmand %vm359, %vm363
        %vm368 = vcmp.ge.s32.totalorder %v352, 24
        %vm369 = vcmp.ge.s32.totalorder %v353, 24
        %vm370 = vcmp.ge.s32.totalorder %v354, 24
        %vm371 = vcmp.ge.s32.totalorder %v355, 24
        %vm372 = vmor %vm364, %vm368
        %vm373 = vmor %vm365, %vm369
        %vm374 = vmor %vm366, %vm370
        %vm375 = vmor %vm367, %vm371
        %vm376 = vcmp.ge.s32.totalorder %v352, 16
        %vm377 = vcmp.ge.s32.totalorder %v353, 16
        %vm378 = vcmp.ge.s32.totalorder %v354, 16
        %vm379 = vcmp.ge.s32.totalorder %v355, 16
        %vm380 = vcmp.lt.s32.totalorder %v348, 16
        %vm381 = vmxor %vm372, 1
        %vm382 = vmxor %vm373, 1
        %vm383 = vmxor %vm374, 1
        %vm384 = vmxor %vm375, 1
        %vm385 = vcmp.lt.s32.totalorder %v350, 15
        %v386 = vsel %vm381, 1, 0
        %v387 = vsel %vm382, 1, 0
        %v388 = vsel %vm383, 1, 0
        %v389 = vsel %vm384, 1, 0
        %vm390 = vcmp.eq.s32.totalorder %v386, 1
        %vm391 = vcmp.eq.s32.totalorder %v387, 1
        %vm392 = vcmp.eq.s32.totalorder %v388, 1
        %vm393 = vcmp.eq.s32.totalorder %v389, 1
        %v394 = vsel %vm385, 1, 0
        %v395 = vlaneseq
        %v396 = vshrl.u32 %v395, 7
        %v397 = vsub.s32 0, %v396
        %v398 = vrot.slane %v394, %v397
        %v399 = vlaneseq
        %v400 = vshrl.u32 %v399, 7
        %v401 = vsub.s32 1, %v400
        %v402 = vrot.slane %v394, %v401
        %vm403 = vcmp.eq.s32.totalorder %v398, 1
        %vm404 = vcmp.eq.s32.totalorder %v402, 1
        %vm405 = vmor %vm390, %vm403
        %vm406 = vmor %vm390, %vm404
        %vm407 = vmor %vm391, %vm403
        %vm408 = vmor %vm391, %vm404
        %vm409 = vmor %vm392, %vm403
        %vm410 = vmor %vm392, %vm404
        %vm411 = vmor %vm393, %vm403
        %vm412 = vmor %vm393, %vm404
        %v413 = vsel %vm380, 1, 0
        %v414 = vlaneseq
        %v415 = vshrl.u32 %v414, 7
        %v416 = vsub.s32 0, %v415
        %v417 = vrot.slane %v413, %v416
        %v418 = vlaneseq
        %v419 = vshrl.u32 %v418, 7
        %v420 = vsub.s32 1, %v419
        %v421 = vrot.slane %v413, %v420
        %vm422 = vcmp.eq.s32.totalorder %v417, 1
        %vm423 = vcmp.eq.s32.totalorder %v421, 1
        %vm424 = vmand %vm422, %vm405
        %vm425 = vmand %vm423, %vm406
        %vm426 = vmand %vm422, %vm407
        %vm427 = vmand %vm423, %vm408
        %vm428 = vmand %vm422, %vm409
        %vm429 = vmand %vm423, %vm410
        %vm430 = vmand %vm422, %vm411
        %vm431 = vmand %vm423, %vm412
        %vm432 = vmxor %vm376, 1
        %vm433 = vmxor %vm377, 1
        %vm434 = vmxor %vm378, 1
        %vm435 = vmxor %vm379, 1
        %vm436 = vcmp.lt.s32.totalorder %v348, 15
        %v437 = vsel %vm432, 1, 0
        %v438 = vsel %vm433, 1, 0
        %v439 = vsel %vm434, 1, 0
        %v440 = vsel %vm435, 1, 0
        %vm441 = vcmp.eq.s32.totalorder %v437, 1
        %vm442 = vcmp.eq.s32.totalorder %v438, 1
        %vm443 = vcmp.eq.s32.totalorder %v439, 1
        %vm444 = vcmp.eq.s32.totalorder %v440, 1
        %v445 = vsel %vm436, 1, 0
        %v446 = vlaneseq
        %v447 = vshrl.u32 %v446, 7
        %v448 = vsub.s32 0, %v447
        %v449 = vrot.slane %v445, %v448
        %v450 = vlaneseq
        %v451 = vshrl.u32 %v450, 7
        %v452 = vsub.s32 1, %v451
        %v453 = vrot.slane %v445, %v452
        %vm454 = vcmp.eq.s32.totalorder %v449, 1
        %vm455 = vcmp.eq.s32.totalorder %v453, 1
        %vm456 = vmor %vm441, %vm454
        %vm457 = vmor %vm441, %vm455
        %vm458 = vmor %vm442, %vm454
        %vm459 = vmor %vm442, %vm455
        %vm460 = vmor %vm443, %vm454
        %vm461 = vmor %vm443, %vm455
        %vm462 = vmor %vm444, %vm454
        %vm463 = vmor %vm444, %vm455
        %vm464 = vmand %vm424, %vm456
        %vm465 = vmand %vm425, %vm457
        %vm466 = vmand %vm426, %vm458
        %vm467 = vmand %vm427, %vm459
        %vm468 = vmand %vm428, %vm460
        %vm469 = vmand %vm429, %vm461
        %vm470 = vmand %vm430, %vm462
        %vm471 = vmand %vm431, %vm463
        %v472 = vsel %vm464, 1, 0
        %v473 = vsel %vm465, 1, 0
        %v474 = vsel %vm466, 1, 0
        %v475 = vsel %vm467, 1, 0
        %v476 = vsel %vm468, 1, 0
        %v477 = vsel %vm469, 1, 0
        %v478 = vsel %vm470, 1, 0
        %v479 = vsel %vm471, 1, 0
        %v480 = vcvt.s32.f32 %v472
        %v481 = vcvt.s32.f32 %v473
        %v482 = vcvt.s32.f32 %v474
        %v483 = vcvt.s32.f32 %v475
        %v484 = vcvt.s32.f32 %v476
        %v485 = vcvt.s32.f32 %v477
        %v486 = vcvt.s32.f32 %v478
        %v487 = vcvt.s32.f32 %v479
        %v488 = vmul.f32 %v326, %v480
        %v489 = vmul.f32 %v328, %v481
        %v490 = vmul.f32 %v332, %v482
        %v491 = vmul.f32 %v334, %v483
        %v492 = vmul.f32 %v338, %v484
        %v493 = vmul.f32 %v340, %v485
        %v494 = vmul.f32 %v344, %v486
        %v495 = vmul.f32 %v346, %v487
        %v496 = vadd.f32 %v488, %v489
        %v497 = vadd.f32 %v496, %v490
        %v498 = vadd.f32 %v497, %v491
        %v499 = vadd.f32 %v498, %v492
        %v500 = vadd.f32 %v499, %v493
        %v501 = vadd.f32 %v500, %v494
        %v502 = vadd.f32 %v501, %v495
        %503 = vadd.xlane.f32.xlu0 %v502
        %v504 = vpop.xlane.xlu0 %503
        %v505 = vrot.slane %v504, 4
        %v506 = vadd.f32 %v504, %v505
        %v507 = vrot.slane %v506, 2
        %v508 = vadd.f32 %v506, %v507
        %v509 = vrot.slane %v508, 1
        %v510 = vadd.f32 %v508, %v509
        %s511 = vtos %v510
        %s512 = smul.f32 %s511, 0.00013007285
        %v513 = vstv %s512
        %v514 = vsub.f32 %v326, %v513
        %v515 = vsub.f32 %v328, %v513
        %v516 = vsub.f32 %v332, %v513
        %v517 = vsub.f32 %v334, %v513
        %v518 = vsub.f32 %v338, %v513
        %v519 = vsub.f32 %v340, %v513
        %v520 = vsub.f32 %v344, %v513
        %v521 = vsub.f32 %v346, %v513
        %v522 = vmul.f32 %v514, %v480
        %v523 = vmul.f32 %v515, %v481
        %v524 = vmul.f32 %v516, %v482
        %v525 = vmul.f32 %v517, %v483
        %v526 = vmul.f32 %v518, %v484
        %v527 = vmul.f32 %v519, %v485
        %v528 = vmul.f32 %v520, %v486
        %v529 = vmul.f32 %v521, %v487
        %v530 = vmul.f32 %v522, %v522
        %v531 = vmul.f32 %v523, %v523
        %v532 = vmul.f32 %v524, %v524
        %v533 = vmul.f32 %v525, %v525
        %v534 = vmul.f32 %v526, %v526
        %v535 = vmul.f32 %v527, %v527
        %v536 = vmul.f32 %v528, %v528
        %v537 = vmul.f32 %v529, %v529
        %v538 = vadd.f32 %v530, %v531
        %v539 = vadd.f32 %v538, %v532
        %v540 = vadd.f32 %v539, %v533
        %v541 = vadd.f32 %v540, %v534
        %v542 = vadd.f32 %v541, %v535
        %v543 = vadd.f32 %v542, %v536
        %v544 = vadd.f32 %v543, %v537
        %545 = vadd.xlane.f32.xlu0 %v544
        %v546 = vpop.xlane.xlu0 %545
        %v547 = vrot.slane %v546, 4
        %v548 = vadd.f32 %v546, %v547
        %v549 = vrot.slane %v548, 2
        %v550 = vadd.f32 %v548, %v549
        %v551 = vrot.slane %v550, 1
        %v552 = vadd.f32 %v550, %v551
        %s553 = vtos %v552
        %s554 = smul.f32 %s553, 0.00013007285
        %v555 = vstv %s554
        %v556 = vadd.f32 %v555, 1e-05
        %v557 = vrsqrt.pop %v556
        %v558 = vld [vmem:[%s3] sm:$0xff]
        %v559 = vld [vmem:[%s3 + $0x8] sm:$0xff]
        %v560 = vld [vmem:[%s3 + $0x10] sm:$0xff]
        %v561 = vld [vmem:[%s3 + $0x18] sm:$0xff]
        %v562 = vmul.f32 %v558, %v557
        %v563 = vmul.f32 %v559, %v557
        %v564 = vmul.f32 %v560, %v557
        %v565 = vmul.f32 %v561, %v557
        %v566 = vld [vmem:[%s4] sm:$0xff]
        %v567 = vld [vmem:[%s4 + $0x8] sm:$0xff]
        %v568 = vld [vmem:[%s4 + $0x10] sm:$0xff]
        %v569 = vld [vmem:[%s4 + $0x18] sm:$0xff]
        %v570 = vmul.f32 %v513, %v562
        %v571 = vmul.f32 %v513, %v563
        %v572 = vmul.f32 %v513, %v564
        %v573 = vmul.f32 %v513, %v565
        %v574 = vsub.f32 %v566, %v570
        %v575 = vsub.f32 %v567, %v571
        %v576 = vsub.f32 %v568, %v572
        %v577 = vsub.f32 %v569, %v573
        %579 = vset.pattern.permute.xlu0 0
        %580 = vperm.xlu0 %579, %v562
        %v581 = vpop.permute.xlu0 %580
        %584 = vset.pattern.permute.xlu0 0
        %585 = vperm.xlu0 %584, %v563
        %v586 = vpop.permute.xlu0 %585
        %589 = vset.pattern.permute.xlu0 0
        %590 = vperm.xlu0 %589, %v564
        %v591 = vpop.permute.xlu0 %590
        %594 = vset.pattern.permute.xlu0 0
        %595 = vperm.xlu0 %594, %v565
        %v596 = vpop.permute.xlu0 %595
        %v598 = vmul.f32 %v326, %v581
        %v599 = vmul.f32 %v328, %v581
        %v600 = vmul.f32 %v332, %v586
        %v601 = vmul.f32 %v334, %v586
        %v602 = vmul.f32 %v338, %v591
        %v603 = vmul.f32 %v340, %v591
        %v604 = vmul.f32 %v344, %v596
        %v605 = vmul.f32 %v346, %v596
        %607 = vset.pattern.permute.xlu0 0
        %608 = vperm.xlu0 %607, %v574
        %v609 = vpop.permute.xlu0 %608
        %612 = vset.pattern.permute.xlu0 0
        %613 = vperm.xlu0 %612, %v575
        %v614 = vpop.permute.xlu0 %613
        %617 = vset.pattern.permute.xlu0 0
        %618 = vperm.xlu0 %617, %v576
        %v619 = vpop.permute.xlu0 %618
        %622 = vset.pattern.permute.xlu0 0
        %623 = vperm.xlu0 %622, %v577
        %v624 = vpop.permute.xlu0 %623
        %v626 = vadd.f32 %v598, %v609
        %v627 = vadd.f32 %v599, %v609
        %v628 = vadd.f32 %v600, %v614
        %v629 = vadd.f32 %v601, %v614
        %v630 = vadd.f32 %v602, %v619
        %v631 = vadd.f32 %v603, %v619
        %v632 = vadd.f32 %v604, %v624
        %v633 = vadd.f32 %v605, %v624
        %v634 = vxor.u32 %v626, 2147483648
        %v635 = vxor.u32 %v627, 2147483648
        %v636 = vxor.u32 %v628, 2147483648
        %v637 = vxor.u32 %v629, 2147483648
        %v638 = vxor.u32 %v630, 2147483648
        %v639 = vxor.u32 %v631, 2147483648
        %v640 = vxor.u32 %v632, 2147483648
        %v641 = vxor.u32 %v633, 2147483648
        %v642 = vmul.f32 %v634, 1.442695
        %v643 = vpow.pop %v642
        %v644 = vmul.f32 %v635, 1.442695
        %v645 = vpow.pop %v644
        %v646 = vmul.f32 %v636, 1.442695
        %v647 = vpow.pop %v646
        %v648 = vmul.f32 %v637, 1.442695
        %v649 = vpow.pop %v648
        %v650 = vmul.f32 %v638, 1.442695
        %v651 = vpow.pop %v650
        %v652 = vmul.f32 %v639, 1.442695
        %v653 = vpow.pop %v652
        %v654 = vmul.f32 %v640, 1.442695
        %v655 = vpow.pop %v654
        %v656 = vmul.f32 %v641, 1.442695
        %v657 = vpow.pop %v656
        %v658 = vadd.f32 %v643, 1.0
        %v659 = vadd.f32 %v645, 1.0
        %v660 = vadd.f32 %v647, 1.0
        %v661 = vadd.f32 %v649, 1.0
        %v662 = vadd.f32 %v651, 1.0
        %v663 = vadd.f32 %v653, 1.0
        %v664 = vadd.f32 %v655, 1.0
        %v665 = vadd.f32 %v657, 1.0
        %v666 = vrcp.pop %v658
        %v667 = vmul.f32 1.0, %v666
        %v668 = vrcp.pop %v659
        %v669 = vmul.f32 1.0, %v668
        %v670 = vrcp.pop %v660
        %v671 = vmul.f32 1.0, %v670
        %v672 = vrcp.pop %v661
        %v673 = vmul.f32 1.0, %v672
        %v674 = vrcp.pop %v662
        %v675 = vmul.f32 1.0, %v674
        %v676 = vrcp.pop %v663
        %v677 = vmul.f32 1.0, %v676
        %v678 = vrcp.pop %v664
        %v679 = vmul.f32 1.0, %v678
        %v680 = vrcp.pop %v665
        %v681 = vmul.f32 1.0, %v680
        %v682 = vmul.f32 %v626, %v667
        %v683 = vmul.f32 %v627, %v669
        %v684 = vmul.f32 %v628, %v671
        %v685 = vmul.f32 %v629, %v673
        %v686 = vmul.f32 %v630, %v675
        %v687 = vmul.f32 %v631, %v677
        %v688 = vmul.f32 %v632, %v679
        %v689 = vmul.f32 %v633, %v681
        %690 = vst [vmem:[%s237] sm:$0xff] %v682
        %691 = vst [vmem:[%s237 + $0x8] sm:$0xff] %v683
        %692 = vst [vmem:[%s237 + $0x10] sm:$0xff] %v684
        %693 = vst [vmem:[%s237 + $0x18] sm:$0xff] %v685
        %694 = vst [vmem:[%s237 + $0x20] sm:$0xff] %v686
        %695 = vst [vmem:[%s237 + $0x28] sm:$0xff] %v687
        %696 = vst [vmem:[%s237 + $0x30] sm:$0xff] %v688
        %697 = vst [vmem:[%s237 + $0x38] sm:$0xff] %v689
        %p698 = scmp.lt.s32.totalorder %s17, 1
        %s699 = scalar_select %p698, %s17, 1
        %s700 = smul.addr %s699, 8
        %s701 = smul.addr %s700, 8
        %s702 = scalar_lea.vmem %s5, %s701
        // Predicated region
        $region45: #{transposed_double_conv.2} parent=39 // pred_check
          %p703 = pneg %p145
        $region46: #{transposed_double_conv.2} parent=39 // pred_check_branch
          %705 = sbr.rel (%p703) target = $region48
        $region47: #{transposed_double_conv.2} parent=39 // pred_region
          _
        $region48: #{transposed_double_conv.2} parent=39 // pred_fallthru
          _
      $region40: #{transposed_double_conv.2} parent=5 // pred_fallthru
        _
      %p706 = scmp.le.s32.totalorder 2, %s12
      // Predicated region
      $region49: #{transposed_double_conv.2} parent=5 // pred_check
        %p707 = pneg %p706
      $region50: #{transposed_double_conv.2} parent=5 // pred_check_branch
        %709 = sbr.rel (%p707) target = $region52
      $region51: #{transposed_double_conv.2} parent=5 // pred_region
        %s710 = ssub.s32 %s12, 2
        // Predicated region
        $region53: #{transposed_double_conv.2} parent=51 // pred_check
          %p711 = pneg %p151
        $region54: #{transposed_double_conv.2} parent=51 // pred_check_branch
          %713 = sbr.rel (%p711) target = $region56
        $region55: #{transposed_double_conv.2} parent=51 // pred_region
          %p714 = scmp.lt.s32.totalorder %s18, 1
          %s715 = scalar_select %p714, %s18, 1
          %s716 = smul.addr %s715, 8
          %s717 = smul.addr %s716, 8
          %s718 = scalar_lea.vmem %s5, %s717
        $region56: #{transposed_double_conv.2} parent=51 // pred_fallthru
          _
      $region52: #{transposed_double_conv.2} parent=5 // pred_fallthru
        _
    $region6: #{transposed_double_conv.2} parent=1 // loop_footer
      %s16 = sadd.s32 1, %s12
    $region7: #{transposed_double_conv.2} parent=1 // loop_footer_branch
      %11 = sbr.rel target = $region3
    $region8: #{transposed_double_conv.2} parent=1 // loop_exit
      _
    %719 = vsyncpa [#allocation3], 1
    %s720 = scalar_lea.sflag [#allocation3], 1
    %721 = vsyncpa %s720, 1

// kernel: transposed_double_conv.3
$region0: #{transposed_double_conv.3}
  #allocation0 [shape = 'u32[]', space=smem, size = 0x4, offset = 0x4, fixed_abs, tag = 'smem constant byte address 0x4 - core index']
  #allocation1 [shape = 'u32[144,128]{1,0:T(1,128)}', space=vmem, size = 0x12000, scoped, tag = 'internal scratch']
  %s0 = inlined_call_operand.vmem [shape: f32[2,32,1024], index: 0, kind: input, shape index: {}]
  %s1 = inlined_call_operand.vmem [shape: f32[32,32], index: 1, kind: input, shape index: {}]
  %s2 = inlined_call_operand.vmem [shape: s32[2,1024], index: 2, kind: input, shape index: {}]
  %s3 = inlined_call_operand.vmem [shape: f32[32,1], index: 3, kind: input, shape index: {}]
  %s4 = inlined_call_operand.vmem [shape: f32[32,1], index: 4, kind: input, shape index: {}]
  %s5 = inlined_call_operand.vmem [shape: f32[2,32,1024], index: 5, kind: output, shape index: {}]
  %s6 = sld [smem:[#allocation0]]
  $region53: #{transposed_double_conv.3} parent=0
    _
  %s8 = ssub.s32 1, %s6
  %s9 = scalar_select 0, %s8, %s6
  loop: start=0, step=1, limit=4
  $region2: #{transposed_double_conv.3} parent=0 // loop_pre_header
    _
  $region3: #{transposed_double_conv.3} parent=0 // loop_header
    %s11 = sphi 0, %s15
    %p12 = scmp.ge.s32.totalorder %s11, 4
    %s21 = sphi 0, %s23
    %s24 = sphi 0, %s21
    %s25 = sphi 0, %s24
    %s41 = sphi 0, %s25
    %s45 = sphi 0, %s45
    %s47 = sphi 0, %s45
    %s48 = sphi 0, %s47
    %s62 = sphi 0, %s48
    %s66 = sphi 0, %s66
    %s68 = sphi 0, %s66
    %s69 = sphi 0, %s68
    %s83 = sphi 0, %s69
    %s87 = sphi 0, %s87
    %s89 = sphi 0, %s87
    %s90 = sphi 0, %s89
    %s104 = sphi 0, %s90
    %s108 = sphi 0, %s108
    %s110 = sphi 0, %s108
    %s111 = sphi 0, %s110
    %s125 = sphi 0, %s111
    %s131 = sphi 0, %s133
    %s134 = sphi 0, %s131
    %s135 = sphi 0, %s134
    %s151 = sphi 0, %s135
  $region4: #{transposed_double_conv.3} parent=0 // loop_header_branch
    %14 = sbr.rel (%p12) target = $region8
  $region5: #{transposed_double_conv.3} parent=0 // loop_body
    %s16 = ssub.s32 %s11, 1
    %s17 = ssub.s32 %s11, 2
    %s18 = sadd.s32 %s11, 1
    %s19 = ssub.s32 %s11, %s18
    %p20 = scmp.eq.s32.totalorder %s19, 0
    %s22 = sadd.s32 %s21, 1
    %s23 = scalar_select %p20, %s21, %s22
    %p26 = pneg %p20
    %p27 = scmp.eq.s32.totalorder %s11, 1
    %p28 = por %p26, %p27
    %p29 = scmp.ne.s32.totalorder %s21, %s24
    %p30 = scmp.eq.s32.totalorder %s11, 0
    %p31 = por %p29, %p30
    %p32 = scmp.ne.s32.totalorder %s21, %s24
    %p33 = scmp.eq.s32.totalorder %s16, 1
    %p34 = por %p32, %p33
    %p35 = scmp.ne.s32.totalorder %s24, %s25
    %p36 = scmp.eq.s32.totalorder %s16, 0
    %p37 = por %p35, %p36
    %p38 = scmp.ne.s32.totalorder %s24, %s25
    %p39 = scmp.eq.s32.totalorder %s17, 1
    %p40 = por %p38, %p39
    %p42 = scmp.ne.s32.totalorder %s25, %s41
    %p43 = scmp.eq.s32.totalorder %s17, 0
    %p44 = por %p42, %p43
    %s46 = sadd.s32 %s45, 1
    %p49 = scmp.eq.s32.totalorder %s11, 1
    %p50 = scmp.ne.s32.totalorder %s45, %s47
    %p51 = scmp.eq.s32.totalorder %s11, 0
    %p52 = por %p50, %p51
    %p53 = scmp.ne.s32.totalorder %s45, %s47
    %p54 = scmp.eq.s32.totalorder %s16, 1
    %p55 = por %p53, %p54
    %p56 = scmp.ne.s32.totalorder %s47, %s48
    %p57 = scmp.eq.s32.totalorder %s16, 0
    %p58 = por %p56, %p57
    %p59 = scmp.ne.s32.totalorder %s47, %s48
    %p60 = scmp.eq.s32.totalorder %s17, 1
    %p61 = por %p59, %p60
    %p63 = scmp.ne.s32.totalorder %s48, %s62
    %p64 = scmp.eq.s32.totalorder %s17, 0
    %p65 = por %p63, %p64
    %s67 = sadd.s32 %s66, 1
    %p70 = scmp.eq.s32.totalorder %s11, 1
    %p71 = scmp.ne.s32.totalorder %s66, %s68
    %p72 = scmp.eq.s32.totalorder %s11, 0
    %p73 = por %p71, %p72
    %p74 = scmp.ne.s32.totalorder %s66, %s68
    %p75 = scmp.eq.s32.totalorder %s16, 1
    %p76 = por %p74, %p75
    %p77 = scmp.ne.s32.totalorder %s68, %s69
    %p78 = scmp.eq.s32.totalorder %s16, 0
    %p79 = por %p77, %p78
    %p80 = scmp.ne.s32.totalorder %s68, %s69
    %p81 = scmp.eq.s32.totalorder %s17, 1
    %p82 = por %p80, %p81
    %p84 = scmp.ne.s32.totalorder %s69, %s83
    %p85 = scmp.eq.s32.totalorder %s17, 0
    %p86 = por %p84, %p85
    %s88 = sadd.s32 %s87, 1
    %p91 = scmp.eq.s32.totalorder %s11, 1
    %p92 = scmp.ne.s32.totalorder %s87, %s89
    %p93 = scmp.eq.s32.totalorder %s11, 0
    %p94 = por %p92, %p93
    %p95 = scmp.ne.s32.totalorder %s87, %s89
    %p96 = scmp.eq.s32.totalorder %s16, 1
    %p97 = por %p95, %p96
    %p98 = scmp.ne.s32.totalorder %s89, %s90
    %p99 = scmp.eq.s32.totalorder %s16, 0
    %p100 = por %p98, %p99
    %p101 = scmp.ne.s32.totalorder %s89, %s90
    %p102 = scmp.eq.s32.totalorder %s17, 1
    %p103 = por %p101, %p102
    %p105 = scmp.ne.s32.totalorder %s90, %s104
    %p106 = scmp.eq.s32.totalorder %s17, 0
    %p107 = por %p105, %p106
    %s109 = sadd.s32 %s108, 1
    %p112 = scmp.eq.s32.totalorder %s11, 1
    %p113 = scmp.ne.s32.totalorder %s108, %s110
    %p114 = scmp.eq.s32.totalorder %s11, 0
    %p115 = por %p113, %p114
    %p116 = scmp.ne.s32.totalorder %s108, %s110
    %p117 = scmp.eq.s32.totalorder %s16, 1
    %p118 = por %p116, %p117
    %p119 = scmp.ne.s32.totalorder %s110, %s111
    %p120 = scmp.eq.s32.totalorder %s16, 0
    %p121 = por %p119, %p120
    %p122 = scmp.ne.s32.totalorder %s110, %s111
    %p123 = scmp.eq.s32.totalorder %s17, 1
    %p124 = por %p122, %p123
    %p126 = scmp.ne.s32.totalorder %s111, %s125
    %p127 = scmp.eq.s32.totalorder %s17, 0
    %p128 = por %p126, %p127
    %s129 = ssub.s32 %s11, %s18
    %p130 = scmp.eq.s32.totalorder %s129, 0
    %s132 = sadd.s32 %s131, 1
    %s133 = scalar_select %p130, %s131, %s132
    %p136 = pneg %p130
    %p137 = scmp.eq.s32.totalorder %s11, 1
    %p138 = por %p136, %p137
    %p139 = scmp.ne.s32.totalorder %s131, %s134
    %p140 = scmp.eq.s32.totalorder %s11, 0
    %p141 = por %p139, %p140
    %p142 = scmp.ne.s32.totalorder %s131, %s134
    %p143 = scmp.eq.s32.totalorder %s16, 1
    %p144 = por %p142, %p143
    %p145 = scmp.ne.s32.totalorder %s134, %s135
    %p146 = scmp.eq.s32.totalorder %s16, 0
    %p147 = por %p145, %p146
    %p148 = scmp.ne.s32.totalorder %s134, %s135
    %p149 = scmp.eq.s32.totalorder %s17, 1
    %p150 = por %p148, %p149
    %p152 = scmp.ne.s32.totalorder %s135, %s151
    %p153 = scmp.eq.s32.totalorder %s17, 0
    %p154 = por %p152, %p153
    %p155 = scmp.le.s32.totalorder 1, %s11
    %p156 = scmp.lt.s32.totalorder %s11, 3
    %p157 = pnand %p155, %p156
    %p158 = pneg %p157
    // Predicated region
    $region9: #{transposed_double_conv.3} parent=5 // pred_check
      _
    $region10: #{transposed_double_conv.3} parent=5 // pred_check_branch
      %160 = sbr.rel (%p157) target = $region12
    $region11: #{transposed_double_conv.3} parent=5 // pred_region
      %s161 = ssub.s32 %s11, 1
      // Predicated region
      $region13: #{transposed_double_conv.3} parent=11 // pred_check
        %p162 = pneg %p58
      $region14: #{transposed_double_conv.3} parent=11 // pred_check_branch
        %164 = sbr.rel (%p162) target = $region16
      $region15: #{transposed_double_conv.3} parent=11 // pred_region
        _
      $region16: #{transposed_double_conv.3} parent=11 // pred_fallthru
        _
      // Predicated region
      $region17: #{transposed_double_conv.3} parent=11 // pred_check
        %p165 = pneg %p79
      $region18: #{transposed_double_conv.3} parent=11 // pred_check_branch
        %167 = sbr.rel (%p165) target = $region20
      $region19: #{transposed_double_conv.3} parent=11 // pred_region
        _
      $region20: #{transposed_double_conv.3} parent=11 // pred_fallthru
        _
      // Predicated region
      $region21: #{transposed_double_conv.3} parent=11 // pred_check
        %p168 = pneg %p100
      $region22: #{transposed_double_conv.3} parent=11 // pred_check_branch
        %170 = sbr.rel (%p168) target = $region24
      $region23: #{transposed_double_conv.3} parent=11 // pred_region
        _
      $region24: #{transposed_double_conv.3} parent=11 // pred_fallthru
        _
      // Predicated region
      $region25: #{transposed_double_conv.3} parent=11 // pred_check
        %p171 = pneg %p121
      $region26: #{transposed_double_conv.3} parent=11 // pred_check_branch
        %173 = sbr.rel (%p171) target = $region28
      $region27: #{transposed_double_conv.3} parent=11 // pred_region
        _
      $region28: #{transposed_double_conv.3} parent=11 // pred_fallthru
        _
    $region12: #{transposed_double_conv.3} parent=5 // pred_fallthru
      _
    %p174 = scmp.lt.s32.totalorder %s11, 2
    // Predicated region
    $region29: #{transposed_double_conv.3} parent=5 // pred_check
      %p175 = pneg %p174
    $region30: #{transposed_double_conv.3} parent=5 // pred_check_branch
      %177 = sbr.rel (%p175) target = $region32
    $region31: #{transposed_double_conv.3} parent=5 // pred_region
      // Predicated region
      $region33: #{transposed_double_conv.3} parent=31 // pred_check
        %p178 = pneg %p31
      $region34: #{transposed_double_conv.3} parent=31 // pred_check_branch
        %180 = sbr.rel (%p178) target = $region36
      $region35: #{transposed_double_conv.3} parent=31 // pred_region
        %p181 = scmp.lt.s32.totalorder %s11, 1
        %s182 = scalar_select %p181, %s11, 1
        %s183 = smul.addr %s182, 32
        %s184 = smul.addr %s183, 8
        %s185 = scalar_lea.vmem %s0, %s184
      $region36: #{transposed_double_conv.3} parent=31 // pred_fallthru
        _
    $region32: #{transposed_double_conv.3} parent=5 // pred_fallthru
      _
    %p186 = scmp.le.s32.totalorder 1, %s11
    %p187 = scmp.lt.s32.totalorder %s11, 3
    %p188 = pnand %p186, %p187
    %p189 = pneg %p188
    // Predicated region
    $region37: #{transposed_double_conv.3} parent=5 // pred_check
      _
    $region38: #{transposed_double_conv.3} parent=5 // pred_check_branch
      %191 = sbr.rel (%p188) target = $region40
    $region39: #{transposed_double_conv.3} parent=5 // pred_region
      %s192 = ssub.s32 %s11, 1
      %p193 = scmp.lt.s32.totalorder %s16, 1
      %s194 = scalar_select %p193, %s16, 1
      %s195 = smul.addr %s194, 32
      %s196 = smul.addr %s195, 8
      %s197 = scalar_lea.vmem %s0, %s196
      %p198 = pneg %p37
      %p199 = pneg %p34
      %p200 = pneg %p58
      %p201 = pneg %p55
      %p202 = pneg %p79
      %p203 = pneg %p76
      %p204 = pneg %p100
      %p205 = pneg %p97
      %p206 = pneg %p121
      %p207 = pneg %p118
      %p208 = pneg %p147
      %p209 = pneg %p144
      %p210 = scmp.lt.s32.totalorder %s16, 1
      %s211 = scalar_select %p210, %s16, 1
      %s212 = smul.addr %s211, 32
      %s213 = smul.addr %s212, 8
      %s214 = scalar_lea.vmem %s5, %s213
      %p215 = scmp.lt.s32.totalorder %s16, 1
      %s216 = scalar_select %p215, %s16, 1
      %s217 = smul.addr %s216, 32
      %s218 = smul.addr %s217, 8
      %s219 = scalar_lea.vmem %s0, %s218
      %p220 = scmp.lt.s32.totalorder %s16, 1
      %s221 = scalar_select %p220, %s16, 1
      %s222 = smul.addr %s221, 32
      %s223 = smul.addr %s222, 8
      %s224 = scalar_lea.vmem %s5, %s223
      %v225 = vld [vmem:[%s1] sm:$0xff]
      %v226 = vld [vmem:[%s1 + $0x8] sm:$0xff]
      %v227 = vld [vmem:[%s1 + $0x10] sm:$0xff]
      %v228 = vld [vmem:[%s1 + $0x18] sm:$0xff]
      %v229 = vld [vmem:[%s219] sm:$0xff]
      %v230 = vld [vmem:[%s219 + $0x8] sm:$0xff]
      %v231 = vld [vmem:[%s219 + $0x10] sm:$0xff]
      %v232 = vld [vmem:[%s219 + $0x18] sm:$0xff]
      %v233 = vld [vmem:[%s219 + $0x20] sm:$0xff]
      %v234 = vld [vmem:[%s219 + $0x28] sm:$0xff]
      %v235 = vld [vmem:[%s219 + $0x30] sm:$0xff]
      %v236 = vld [vmem:[%s219 + $0x38] sm:$0xff]
      %v237 = vld [vmem:[%s219 + $0x40] sm:$0xff]
      %v238 = vld [vmem:[%s219 + $0x48] sm:$0xff]
      %v239 = vld [vmem:[%s219 + $0x50] sm:$0xff]
      %v240 = vld [vmem:[%s219 + $0x58] sm:$0xff]
      %v241 = vld [vmem:[%s219 + $0x60] sm:$0xff]
      %v242 = vld [vmem:[%s219 + $0x68] sm:$0xff]
      %v243 = vld [vmem:[%s219 + $0x70] sm:$0xff]
      %v244 = vld [vmem:[%s219 + $0x78] sm:$0xff]
      %v245 = vld [vmem:[%s219 + $0x80] sm:$0xff]
      %v246 = vld [vmem:[%s219 + $0x88] sm:$0xff]
      %v247 = vld [vmem:[%s219 + $0x90] sm:$0xff]
      %v248 = vld [vmem:[%s219 + $0x98] sm:$0xff]
      %v249 = vld [vmem:[%s219 + $0xa0] sm:$0xff]
      %v250 = vld [vmem:[%s219 + $0xa8] sm:$0xff]
      %v251 = vld [vmem:[%s219 + $0xb0] sm:$0xff]
      %v252 = vld [vmem:[%s219 + $0xb8] sm:$0xff]
      %v253 = vld [vmem:[%s219 + $0xc0] sm:$0xff]
      %v254 = vld [vmem:[%s219 + $0xc8] sm:$0xff]
      %v255 = vld [vmem:[%s219 + $0xd0] sm:$0xff]
      %v256 = vld [vmem:[%s219 + $0xd8] sm:$0xff]
      %v257 = vld [vmem:[%s219 + $0xe0] sm:$0xff]
      %v258 = vld [vmem:[%s219 + $0xe8] sm:$0xff]
      %v259 = vld [vmem:[%s219 + $0xf0] sm:$0xff]
      %v260 = vld [vmem:[%s219 + $0xf8] sm:$0xff]
      %vm261 = vcmask 261120
      %v263 = vsel %vm261, %v225, 0
      %v266 = vsel %vm261, %v226, 0
      %v269 = vsel %vm261, %v227, 0
      %v272 = vsel %vm261, %v228, 0
      %274 = vmatprep.subr.mxu0 0.0
      %275 = vmatpush1.msra.mxu0 0.0
      %276 = vmatprep.subr.mxu0 0.0
      %277 = vmatpush1.msra.mxu0 0.0
      %278 = vmatprep.subr.mxu0 0.0
      %279 = vmatpush1.msra.mxu0 0.0
      %280 = vmatprep.subr.mxu0 0.0
      %281 = vmatpush1.msra.mxu0 0.0
      %282 = vmatprep.subr.mxu0 0.0
      %283 = vmatpush1.msra.mxu0 0.0
      %284 = vmatprep.subr.mxu0 0.0
      %285 = vmatpush1.msra.mxu0 0.0
      %286 = vmatprep.subr.mxu0 0.0
      %287 = vmatpush1.msra.mxu0 0.0
      %288 = vmatprep.subr.mxu0 0.0
      %289 = vmatpush1.msra.mxu0 0.0
      %290 = vmatprep.subr.mxu0 0.0
      %291 = vmatpush1.msra.mxu0 0.0
      %292 = vmatprep.subr.mxu0 0.0
      %293 = vmatpush1.msra.mxu0 0.0
      %294 = vmatprep.subr.mxu0 0.0
      %295 = vmatpush1.msra.mxu0 0.0
      %296 = vmatprep.subr.mxu0 0.0
      %297 = vmatpush1.msra.mxu0 0.0
      %298 = vmatprep.subr.mxu0 %v254
      %299 = vmatpush1.msra.mxu0 %v253
      %300 = vmatprep.subr.mxu0 %v246
      %301 = vmatpush1.msra.mxu0 %v245
      %302 = vmatprep.subr.mxu0 %v238
      %303 = vmatpush1.msra.mxu0 %v237
      %304 = vmatprep.subr.mxu0 %v230
      %305 = vmatpush1.msra.mxu0 %v229
      %306 = vmatprep.subr.mxu0 0.0
      %307 = vmatpush2.msra.mxu0 0.0
      %308 = vmatprep.subr.mxu0 0.0
      %309 = vmatpush2.msra.mxu0 0.0
      %310 = vmatprep.subr.mxu0 0.0
      %311 = vmatpush2.msra.mxu0 0.0
      %312 = vmatprep.subr.mxu0 0.0
      %313 = vmatpush2.msra.mxu0 0.0
      %314 = vmatprep.subr.mxu0 0.0
      %315 = vmatpush2.msra.mxu0 0.0
      %316 = vmatprep.subr.mxu0 0.0
      %317 = vmatpush2.msra.mxu0 0.0
      %318 = vmatprep.subr.mxu0 0.0
      %319 = vmatpush2.msra.mxu0 0.0
      %320 = vmatprep.subr.mxu0 0.0
      %321 = vmatpush2.msra.mxu0 0.0
      %322 = vmatprep.subr.mxu0 0.0
      %323 = vmatpush2.msra.mxu0 0.0
      %324 = vmatprep.subr.mxu0 0.0
      %325 = vmatpush2.msra.mxu0 0.0
      %326 = vmatprep.subr.mxu0 0.0
      %327 = vmatpush2.msra.mxu0 0.0
      %328 = vmatprep.subr.mxu0 0.0
      %329 = vmatpush2.msra.mxu0 0.0
      %330 = vmatprep.subr.mxu0 0.0
      %331 = vmatpush2.msra.mxu0 0.0
      %332 = vmatprep.subr.mxu0 0.0
      %333 = vmatpush2.msra.mxu0 0.0
      %334 = vmatprep.subr.mxu0 0.0
      %335 = vmatpush2.msra.mxu0 0.0
      %336 = vmatprep.subr.mxu0 0.0
      %337 = vmatpush2.msra.mxu0 0.0
      %338 = vmatprep.mubr.f32.mxu0 0.0
      %339 = vmatmul.mubr.f32.gmra.mxu0 %v263
      %v340 = vpop.f32.mrf.mxu0
      %v341 = vadd.f32 0.0, %v340
      %v342 = vpop.f32.mrf.mxu0
      %v343 = vadd.f32 0.0, %v342
      %344 = vmatprep.mubr.f32.mxu0 0.0
      %345 = vmatmul.mubr.f32.gmra.mxu0 %v266
      %v346 = vpop.f32.mrf.mxu0
      %v347 = vadd.f32 0.0, %v346
      %v348 = vpop.f32.mrf.mxu0
      %v349 = vadd.f32 0.0, %v348
      %350 = vmatprep.mubr.f32.mxu0 0.0
      %351 = vmatmul.mubr.f32.gmra.mxu0 %v269
      %v352 = vpop.f32.mrf.mxu0
      %v353 = vadd.f32 0.0, %v352
      %v354 = vpop.f32.mrf.mxu0
      %v355 = vadd.f32 0.0, %v354
      %356 = vmatprep.mubr.f32.mxu0 0.0
      %357 = vmatmul.mubr.f32.gmra.mxu0 %v272
      %v358 = vpop.f32.mrf.mxu0
      %v359 = vadd.f32 0.0, %v358
      %v360 = vpop.f32.mrf.mxu0
      %v361 = vadd.f32 0.0, %v360
      %362 = vdwg.mxu0
      %363 = vmatprep.subr.mxu0 0.0
      %364 = vmatpush1.msra.mxu0 0.0
      %365 = vmatprep.subr.mxu0 0.0
      %366 = vmatpush1.msra.mxu0 0.0
      %367 = vmatprep.subr.mxu0 0.0
      %368 = vmatpush1.msra.mxu0 0.0
      %369 = vmatprep.subr.mxu0 0.0
      %370 = vmatpush1.msra.mxu0 0.0
      %371 = vmatprep.subr.mxu0 0.0
      %372 = vmatpush1.msra.mxu0 0.0
      %373 = vmatprep.subr.mxu0 0.0
      %374 = vmatpush1.msra.mxu0 0.0
      %375 = vmatprep.subr.mxu0 0.0
      %376 = vmatpush1.msra.mxu0 0.0
      %377 = vmatprep.subr.mxu0 0.0
      %378 = vmatpush1.msra.mxu0 0.0
      %379 = vmatprep.subr.mxu0 0.0
      %380 = vmatpush1.msra.mxu0 0.0
      %381 = vmatprep.subr.mxu0 0.0
      %382 = vmatpush1.msra.mxu0 0.0
      %383 = vmatprep.subr.mxu0 0.0
      %384 = vmatpush1.msra.mxu0 0.0
      %385 = vmatprep.subr.mxu0 0.0
      %386 = vmatpush1.msra.mxu0 0.0
      %387 = vmatprep.subr.mxu0 %v256
      %388 = vmatpush1.msra.mxu0 %v255
      %389 = vmatprep.subr.mxu0 %v248
      %390 = vmatpush1.msra.mxu0 %v247
      %391 = vmatprep.subr.mxu0 %v240
      %392 = vmatpush1.msra.mxu0 %v239
      %393 = vmatprep.subr.mxu0 %v232
      %394 = vmatpush1.msra.mxu0 %v231
      %395 = vmatprep.subr.mxu0 0.0
      %396 = vmatpush2.msra.mxu0 0.0
      %397 = vmatprep.subr.mxu0 0.0
      %398 = vmatpush2.msra.mxu0 0.0
      %399 = vmatprep.subr.mxu0 0.0
      %400 = vmatpush2.msra.mxu0 0.0
      %401 = vmatprep.subr.mxu0 0.0
      %402 = vmatpush2.msra.mxu0 0.0
      %403 = vmatprep.subr.mxu0 0.0
      %404 = vmatpush2.msra.mxu0 0.0
      %405 = vmatprep.subr.mxu0 0.0
      %406 = vmatpush2.msra.mxu0 0.0
      %407 = vmatprep.subr.mxu0 0.0
      %408 = vmatpush2.msra.mxu0 0.0
      %409 = vmatprep.subr.mxu0 0.0
      %410 = vmatpush2.msra.mxu0 0.0
      %411 = vmatprep.subr.mxu0 0.0
      %412 = vmatpush2.msra.mxu0 0.0
      %413 = vmatprep.subr.mxu0 0.0
      %414 = vmatpush2.msra.mxu0 0.0
      %415 = vmatprep.subr.mxu0 0.0
      %416 = vmatpush2.msra.mxu0 0.0
      %417 = vmatprep.subr.mxu0 0.0
      %418 = vmatpush2.msra.mxu0 0.0
      %419 = vmatprep.subr.mxu0 0.0
      %420 = vmatpush2.msra.mxu0 0.0
      %421 = vmatprep.subr.mxu0 0.0
      %422 = vmatpush2.msra.mxu0 0.0
      %423 = vmatprep.subr.mxu0 0.0
      %424 = vmatpush2.msra.mxu0 0.0
      %425 = vmatprep.subr.mxu0 0.0
      %426 = vmatpush2.msra.mxu0 0.0
      %427 = vmatprep.mubr.f32.mxu0 0.0
      %428 = vmatmul.mubr.f32.gmra.mxu0 %v263
      %v429 = vpop.f32.mrf.mxu0
      %v430 = vadd.f32 0.0, %v429
      %v431 = vpop.f32.mrf.mxu0
      %v432 = vadd.f32 0.0, %v431
      %433 = vmatprep.mubr.f32.mxu0 0.0
      %434 = vmatmul.mubr.f32.gmra.mxu0 %v266
      %v435 = vpop.f32.mrf.mxu0
      %v436 = vadd.f32 0.0, %v435
      %v437 = vpop.f32.mrf.mxu0
      %v438 = vadd.f32 0.0, %v437
      %439 = vmatprep.mubr.f32.mxu0 0.0
      %440 = vmatmul.mubr.f32.gmra.mxu0 %v269
      %v441 = vpop.f32.mrf.mxu0
      %v442 = vadd.f32 0.0, %v441
      %v443 = vpop.f32.mrf.mxu0
      %v444 = vadd.f32 0.0, %v443
      %445 = vmatprep.mubr.f32.mxu0 0.0
      %446 = vmatmul.mubr.f32.gmra.mxu0 %v272
      %v447 = vpop.f32.mrf.mxu0
      %v448 = vadd.f32 0.0, %v447
      %v449 = vpop.f32.mrf.mxu0
      %v450 = vadd.f32 0.0, %v449
      %451 = vdwg.mxu0
      %452 = vmatprep.subr.mxu0 0.0
      %453 = vmatpush1.msra.mxu0 0.0
      %454 = vmatprep.subr.mxu0 0.0
      %455 = vmatpush1.msra.mxu0 0.0
      %456 = vmatprep.subr.mxu0 0.0
      %457 = vmatpush1.msra.mxu0 0.0
      %458 = vmatprep.subr.mxu0 0.0
      %459 = vmatpush1.msra.mxu0 0.0
      %460 = vmatprep.subr.mxu0 0.0
      %461 = vmatpush1.msra.mxu0 0.0
      %462 = vmatprep.subr.mxu0 0.0
      %463 = vmatpush1.msra.mxu0 0.0
      %464 = vmatprep.subr.mxu0 0.0
      %465 = vmatpush1.msra.mxu0 0.0
      %466 = vmatprep.subr.mxu0 0.0
      %467 = vmatpush1.msra.mxu0 0.0
      %468 = vmatprep.subr.mxu0 0.0
      %469 = vmatpush1.msra.mxu0 0.0
      %470 = vmatprep.subr.mxu0 0.0
      %471 = vmatpush1.msra.mxu0 0.0
      %472 = vmatprep.subr.mxu0 0.0
      %473 = vmatpush1.msra.mxu0 0.0
      %474 = vmatprep.subr.mxu0 0.0
      %475 = vmatpush1.msra.mxu0 0.0
      %476 = vmatprep.subr.mxu0 %v258
      %477 = vmatpush1.msra.mxu0 %v257
      %478 = vmatprep.subr.mxu0 %v250
      %479 = vmatpush1.msra.mxu0 %v249
      %480 = vmatprep.subr.mxu0 %v242
      %481 = vmatpush1.msra.mxu0 %v241
      %482 = vmatprep.subr.mxu0 %v234
      %483 = vmatpush1.msra.mxu0 %v233
      %484 = vmatprep.subr.mxu0 0.0
      %485 = vmatpush2.msra.mxu0 0.0
      %486 = vmatprep.subr.mxu0 0.0
      %487 = vmatpush2.msra.mxu0 0.0
      %488 = vmatprep.subr.mxu0 0.0
      %489 = vmatpush2.msra.mxu0 0.0
      %490 = vmatprep.subr.mxu0 0.0
      %491 = vmatpush2.msra.mxu0 0.0
      %492 = vmatprep.subr.mxu0 0.0
      %493 = vmatpush2.msra.mxu0 0.0
      %494 = vmatprep.subr.mxu0 0.0
      %495 = vmatpush2.msra.mxu0 0.0
      %496 = vmatprep.subr.mxu0 0.0
      %497 = vmatpush2.msra.mxu0 0.0
      %498 = vmatprep.subr.mxu0 0.0
      %499 = vmatpush2.msra.mxu0 0.0
      %500 = vmatprep.subr.mxu0 0.0
      %501 = vmatpush2.msra.mxu0 0.0
      %502 = vmatprep.subr.mxu0 0.0
      %503 = vmatpush2.msra.mxu0 0.0
      %504 = vmatprep.subr.mxu0 0.0
      %505 = vmatpush2.msra.mxu0 0.0
      %506 = vmatprep.subr.mxu0 0.0
      %507 = vmatpush2.msra.mxu0 0.0
      %508 = vmatprep.subr.mxu0 0.0
      %509 = vmatpush2.msra.mxu0 0.0
      %510 = vmatprep.subr.mxu0 0.0
      %511 = vmatpush2.msra.mxu0 0.0
      %512 = vmatprep.subr.mxu0 0.0
      %513 = vmatpush2.msra.mxu0 0.0
      %514 = vmatprep.subr.mxu0 0.0
      %515 = vmatpush2.msra.mxu0 0.0
      %516 = vmatprep.mubr.f32.mxu0 0.0
      %517 = vmatmul.mubr.f32.gmra.mxu0 %v263
      %v518 = vpop.f32.mrf.mxu0
      %v519 = vadd.f32 0.0, %v518
      %v520 = vpop.f32.mrf.mxu0
      %v521 = vadd.f32 0.0, %v520
      %522 = vmatprep.mubr.f32.mxu0 0.0
      %523 = vmatmul.mubr.f32.gmra.mxu0 %v266
      %v524 = vpop.f32.mrf.mxu0
      %v525 = vadd.f32 0.0, %v524
      %v526 = vpop.f32.mrf.mxu0
      %v527 = vadd.f32 0.0, %v526
      %528 = vmatprep.mubr.f32.mxu0 0.0
      %529 = vmatmul.mubr.f32.gmra.mxu0 %v269
      %v530 = vpop.f32.mrf.mxu0
      %v531 = vadd.f32 0.0, %v530
      %v532 = vpop.f32.mrf.mxu0
      %v533 = vadd.f32 0.0, %v532
      %534 = vmatprep.mubr.f32.mxu0 0.0
      %535 = vmatmul.mubr.f32.gmra.mxu0 %v272
      %v536 = vpop.f32.mrf.mxu0
      %v537 = vadd.f32 0.0, %v536
      %v538 = vpop.f32.mrf.mxu0
      %v539 = vadd.f32 0.0, %v538
      %540 = vdwg.mxu0
      %541 = vmatprep.subr.mxu0 0.0
      %542 = vmatpush1.msra.mxu0 0.0
      %543 = vmatprep.subr.mxu0 0.0
      %544 = vmatpush1.msra.mxu0 0.0
      %545 = vmatprep.subr.mxu0 0.0
      %546 = vmatpush1.msra.mxu0 0.0
      %547 = vmatprep.subr.mxu0 0.0
      %548 = vmatpush1.msra.mxu0 0.0
      %549 = vmatprep.subr.mxu0 0.0
      %550 = vmatpush1.msra.mxu0 0.0
      %551 = vmatprep.subr.mxu0 0.0
      %552 = vmatpush1.msra.mxu0 0.0
      %553 = vmatprep.subr.mxu0 0.0
      %554 = vmatpush1.msra.mxu0 0.0
      %555 = vmatprep.subr.mxu0 0.0
      %556 = vmatpush1.msra.mxu0 0.0
      %557 = vmatprep.subr.mxu0 0.0
      %558 = vmatpush1.msra.mxu0 0.0
      %559 = vmatprep.subr.mxu0 0.0
      %560 = vmatpush1.msra.mxu0 0.0
      %561 = vmatprep.subr.mxu0 0.0
      %562 = vmatpush1.msra.mxu0 0.0
      %563 = vmatprep.subr.mxu0 0.0
      %564 = vmatpush1.msra.mxu0 0.0
      %565 = vmatprep.subr.mxu0 %v260
      %566 = vmatpush1.msra.mxu0 %v259
      %567 = vmatprep.subr.mxu0 %v252
      %568 = vmatpush1.msra.mxu0 %v251
      %569 = vmatprep.subr.mxu0 %v244
      %570 = vmatpush1.msra.mxu0 %v243
      %571 = vmatprep.subr.mxu0 %v236
      %572 = vmatpush1.msra.mxu0 %v235
      %573 = vmatprep.subr.mxu0 0.0
      %574 = vmatpush2.msra.mxu0 0.0
      %575 = vmatprep.subr.mxu0 0.0
      %576 = vmatpush2.msra.mxu0 0.0
      %577 = vmatprep.subr.mxu0 0.0
      %578 = vmatpush2.msra.mxu0 0.0
      %579 = vmatprep.subr.mxu0 0.0
      %580 = vmatpush2.msra.mxu0 0.0
      %581 = vmatprep.subr.mxu0 0.0
      %582 = vmatpush2.msra.mxu0 0.0
      %583 = vmatprep.subr.mxu0 0.0
      %584 = vmatpush2.msra.mxu0 0.0
      %585 = vmatprep.subr.mxu0 0.0
      %586 = vmatpush2.msra.mxu0 0.0
      %587 = vmatprep.subr.mxu0 0.0
      %588 = vmatpush2.msra.mxu0 0.0
      %589 = vmatprep.subr.mxu0 0.0
      %590 = vmatpush2.msra.mxu0 0.0
      %591 = vmatprep.subr.mxu0 0.0
      %592 = vmatpush2.msra.mxu0 0.0
      %593 = vmatprep.subr.mxu0 0.0
      %594 = vmatpush2.msra.mxu0 0.0
      %595 = vmatprep.subr.mxu0 0.0
      %596 = vmatpush2.msra.mxu0 0.0
      %597 = vmatprep.subr.mxu0 0.0
      %598 = vmatpush2.msra.mxu0 0.0
      %599 = vmatprep.subr.mxu0 0.0
      %600 = vmatpush2.msra.mxu0 0.0
      %601 = vmatprep.subr.mxu0 0.0
      %602 = vmatpush2.msra.mxu0 0.0
      %603 = vmatprep.subr.mxu0 0.0
      %604 = vmatpush2.msra.mxu0 0.0
      %605 = vmatprep.mubr.f32.mxu0 0.0
      %606 = vmatmul.mubr.f32.gmra.mxu0 %v263
      %v607 = vpop.f32.mrf.mxu0
      %v608 = vadd.f32 0.0, %v607
      %v609 = vpop.f32.mrf.mxu0
      %v610 = vadd.f32 0.0, %v609
      %611 = vmatprep.mubr.f32.mxu0 0.0
      %612 = vmatmul.mubr.f32.gmra.mxu0 %v266
      %v613 = vpop.f32.mrf.mxu0
      %v614 = vadd.f32 0.0, %v613
      %v615 = vpop.f32.mrf.mxu0
      %v616 = vadd.f32 0.0, %v615
      %617 = vmatprep.mubr.f32.mxu0 0.0
      %618 = vmatmul.mubr.f32.gmra.mxu0 %v269
      %v619 = vpop.f32.mrf.mxu0
      %v620 = vadd.f32 0.0, %v619
      %v621 = vpop.f32.mrf.mxu0
      %v622 = vadd.f32 0.0, %v621
      %623 = vmatprep.mubr.f32.mxu0 0.0
      %624 = vmatmul.mubr.f32.gmra.mxu0 %v272
      %v625 = vpop.f32.mrf.mxu0
      %v626 = vadd.f32 0.0, %v625
      %v627 = vpop.f32.mrf.mxu0
      %v628 = vadd.f32 0.0, %v627
      %629 = vdwg.mxu0
      %v630 = vld [vmem:[%s2] ss:$2 sm:$0xff]
      %s631 = scalar_lea.vmem %s2, 1
      %v632 = vld [vmem:[%s631] ss:$2 sm:$0xff]
      %v633 = vlaneseq
      %v634 = vshrl.u32 %v633, 7
      %v635 = vadd.s32 %v634, 8
      %v636 = vadd.s32 %v634, 16
      %v637 = vadd.s32 %v634, 24
      %vm638 = vcmp.ge.s32.totalorder %v634, 8
      %vm639 = vcmp.ge.s32.totalorder %v635, 8
      %vm640 = vcmp.ge.s32.totalorder %v636, 8
      %vm641 = vcmp.ge.s32.totalorder %v637, 8
      %vm642 = vcmp.lt.s32.totalorder %v634, 16
      %vm643 = vcmp.lt.s32.totalorder %v635, 16
      %vm644 = vcmp.lt.s32.totalorder %v636, 16
      %vm645 = vcmp.lt.s32.totalorder %v637, 16
      %vm646 = vmand %vm638, %vm642
      %vm647 = vmand %vm639, %vm643
      %vm648 = vmand %vm640, %vm644
      %vm649 = vmand %vm641, %vm645
      %vm650 = vcmp.ge.s32.totalorder %v634, 24
      %vm651 = vcmp.ge.s32.totalorder %v635, 24
      %vm652 = vcmp.ge.s32.totalorder %v636, 24
      %vm653 = vcmp.ge.s32.totalorder %v637, 24
      %vm654 = vmor %vm646, %vm650
      %vm655 = vmor %vm647, %vm651
      %vm656 = vmor %vm648, %vm652
      %vm657 = vmor %vm649, %vm653
      %vm658 = vcmp.ge.s32.totalorder %v634, 16
      %vm659 = vcmp.ge.s32.totalorder %v635, 16
      %vm660 = vcmp.ge.s32.totalorder %v636, 16
      %vm661 = vcmp.ge.s32.totalorder %v637, 16
      %vm662 = vcmp.lt.s32.totalorder %v630, 31
      %vm663 = vmxor %vm654, 1
      %vm664 = vmxor %vm655, 1
      %vm665 = vmxor %vm656, 1
      %vm666 = vmxor %vm657, 1
      %vm667 = vcmp.lt.s32.totalorder %v632, 30
      %v668 = vsel %vm663, 1, 0
      %v669 = vsel %vm664, 1, 0
      %v670 = vsel %vm665, 1, 0
      %v671 = vsel %vm666, 1, 0
      %vm672 = vcmp.eq.s32.totalorder %v668, 1
      %vm673 = vcmp.eq.s32.totalorder %v669, 1
      %vm674 = vcmp.eq.s32.totalorder %v670, 1
      %vm675 = vcmp.eq.s32.totalorder %v671, 1
      %v676 = vsel %vm667, 1, 0
      %v677 = vlaneseq
      %v678 = vshrl.u32 %v677, 7
      %v679 = vsub.s32 0, %v678
      %v680 = vrot.slane %v676, %v679
      %v681 = vlaneseq
      %v682 = vshrl.u32 %v681, 7
      %v683 = vsub.s32 1, %v682
      %v684 = vrot.slane %v676, %v683
      %v685 = vlaneseq
      %v686 = vshrl.u32 %v685, 7
      %v687 = vsub.s32 2, %v686
      %v688 = vrot.slane %v676, %v687
      %v689 = vlaneseq
      %v690 = vshrl.u32 %v689, 7
      %v691 = vsub.s32 3, %v690
      %v692 = vrot.slane %v676, %v691
      %v693 = vlaneseq
      %v694 = vshrl.u32 %v693, 7
      %v695 = vsub.s32 4, %v694
      %v696 = vrot.slane %v676, %v695
      %v697 = vlaneseq
      %v698 = vshrl.u32 %v697, 7
      %v699 = vsub.s32 5, %v698
      %v700 = vrot.slane %v676, %v699
      %v701 = vlaneseq
      %v702 = vshrl.u32 %v701, 7
      %v703 = vsub.s32 6, %v702
      %v704 = vrot.slane %v676, %v703
      %v705 = vlaneseq
      %v706 = vshrl.u32 %v705, 7
      %v707 = vsub.s32 7, %v706
      %v708 = vrot.slane %v676, %v707
      %vm709 = vcmp.eq.s32.totalorder %v680, 1
      %vm710 = vcmp.eq.s32.totalorder %v684, 1
      %vm711 = vcmp.eq.s32.totalorder %v688, 1
      %vm712 = vcmp.eq.s32.totalorder %v692, 1
      %vm713 = vcmp.eq.s32.totalorder %v696, 1
      %vm714 = vcmp.eq.s32.totalorder %v700, 1
      %vm715 = vcmp.eq.s32.totalorder %v704, 1
      %vm716 = vcmp.eq.s32.totalorder %v708, 1
      %vm717 = vmor %vm672, %vm709
      %vm718 = vmor %vm672, %vm710
      %vm719 = vmor %vm672, %vm711
      %vm720 = vmor %vm672, %vm712
      %vm721 = vmor %vm672, %vm713
      %vm722 = vmor %vm672, %vm714
      %vm723 = vmor %vm672, %vm715
      %vm724 = vmor %vm672, %vm716
      %vm725 = vmor %vm673, %vm709
      %vm726 = vmor %vm673, %vm710
      %vm727 = vmor %vm673, %vm711
      %vm728 = vmor %vm673, %vm712
      %vm729 = vmor %vm673, %vm713
      %vm730 = vmor %vm673, %vm714
      %vm731 = vmor %vm673, %vm715
      %vm732 = vmor %vm673, %vm716
      %vm733 = vmor %vm674, %vm709
      %vm734 = vmor %vm674, %vm710
      %vm735 = vmor %vm674, %vm711
      %vm736 = vmor %vm674, %vm712
      %vm737 = vmor %vm674, %vm713
      %vm738 = vmor %vm674, %vm714
      %vm739 = vmor %vm674, %vm715
      %vm740 = vmor %vm674, %vm716
      %vm741 = vmor %vm675, %vm709
      %vm742 = vmor %vm675, %vm710
      %vm743 = vmor %vm675, %vm711
      %vm744 = vmor %vm675, %vm712
      %vm745 = vmor %vm675, %vm713
      %vm746 = vmor %vm675, %vm714
      %vm747 = vmor %vm675, %vm715
      %vm748 = vmor %vm675, %vm716
      %v749 = vsel %vm662, 1, 0
      %v750 = vlaneseq
      %v751 = vshrl.u32 %v750, 7
      %v752 = vsub.s32 0, %v751
      %v753 = vrot.slane %v749, %v752
      %v754 = vlaneseq
      %v755 = vshrl.u32 %v754, 7
      %v756 = vsub.s32 1, %v755
      %v757 = vrot.slane %v749, %v756
      %v758 = vlaneseq
      %v759 = vshrl.u32 %v758, 7
      %v760 = vsub.s32 2, %v759
      %v761 = vrot.slane %v749, %v760
      %v762 = vlaneseq
      %v763 = vshrl.u32 %v762, 7
      %v764 = vsub.s32 3, %v763
      %v765 = vrot.slane %v749, %v764
      %v766 = vlaneseq
      %v767 = vshrl.u32 %v766, 7
      %v768 = vsub.s32 4, %v767
      %v769 = vrot.slane %v749, %v768
      %v770 = vlaneseq
      %v771 = vshrl.u32 %v770, 7
      %v772 = vsub.s32 5, %v771
      %v773 = vrot.slane %v749, %v772
      %v774 = vlaneseq
      %v775 = vshrl.u32 %v774, 7
      %v776 = vsub.s32 6, %v775
      %v777 = vrot.slane %v749, %v776
      %v778 = vlaneseq
      %v779 = vshrl.u32 %v778, 7
      %v780 = vsub.s32 7, %v779
      %v781 = vrot.slane %v749, %v780
      %vm782 = vcmp.eq.s32.totalorder %v753, 1
      %vm783 = vcmp.eq.s32.totalorder %v757, 1
      %vm784 = vcmp.eq.s32.totalorder %v761, 1
      %vm785 = vcmp.eq.s32.totalorder %v765, 1
      %vm786 = vcmp.eq.s32.totalorder %v769, 1
      %vm787 = vcmp.eq.s32.totalorder %v773, 1
      %vm788 = vcmp.eq.s32.totalorder %v777, 1
      %vm789 = vcmp.eq.s32.totalorder %v781, 1
      %vm790 = vmand %vm782, %vm717
      %vm791 = vmand %vm783, %vm718
      %vm792 = vmand %vm784, %vm719
      %vm793 = vmand %vm785, %vm720
      %vm794 = vmand %vm786, %vm721
      %vm795 = vmand %vm787, %vm722
      %vm796 = vmand %vm788, %vm723
      %vm797 = vmand %vm789, %vm724
      %vm798 = vmand %vm782, %vm725
      %vm799 = vmand %vm783, %vm726
      %vm800 = vmand %vm784, %vm727
      %vm801 = vmand %vm785, %vm728
      %vm802 = vmand %vm786, %vm729
      %vm803 = vmand %vm787, %vm730
      %vm804 = vmand %vm788, %vm731
      %vm805 = vmand %vm789, %vm732
      %vm806 = vmand %vm782, %vm733
      %vm807 = vmand %vm783, %vm734
      %vm808 = vmand %vm784, %vm735
      %vm809 = vmand %vm785, %vm736
      %vm810 = vmand %vm786, %vm737
      %vm811 = vmand %vm787, %vm738
      %vm812 = vmand %vm788, %vm739
      %vm813 = vmand %vm789, %vm740
      %vm814 = vmand %vm782, %vm741
      %vm815 = vmand %vm783, %vm742
      %vm816 = vmand %vm784, %vm743
      %vm817 = vmand %vm785, %vm744
      %vm818 = vmand %vm786, %vm745
      %vm819 = vmand %vm787, %vm746
      %vm820 = vmand %vm788, %vm747
      %vm821 = vmand %vm789, %vm748
      %vm822 = vmxor %vm658, 1
      %vm823 = vmxor %vm659, 1
      %vm824 = vmxor %vm660, 1
      %vm825 = vmxor %vm661, 1
      %vm826 = vcmp.lt.s32.totalorder %v630, 30
      %v827 = vsel %vm822, 1, 0
      %v828 = vsel %vm823, 1, 0
      %v829 = vsel %vm824, 1, 0
      %v830 = vsel %vm825, 1, 0
      %vm831 = vcmp.eq.s32.totalorder %v827, 1
      %vm832 = vcmp.eq.s32.totalorder %v828, 1
      %vm833 = vcmp.eq.s32.totalorder %v829, 1
      %vm834 = vcmp.eq.s32.totalorder %v830, 1
      %v835 = vsel %vm826, 1, 0
      %v836 = vlaneseq
      %v837 = vshrl.u32 %v836, 7
      %v838 = vsub.s32 0, %v837
      %v839 = vrot.slane %v835, %v838
      %v840 = vlaneseq
      %v841 = vshrl.u32 %v840, 7
      %v842 = vsub.s32 1, %v841
      %v843 = vrot.slane %v835, %v842
      %v844 = vlaneseq
      %v845 = vshrl.u32 %v844, 7
      %v846 = vsub.s32 2, %v845
      %v847 = vrot.slane %v835, %v846
      %v848 = vlaneseq
      %v849 = vshrl.u32 %v848, 7
      %v850 = vsub.s32 3, %v849
      %v851 = vrot.slane %v835, %v850
      %v852 = vlaneseq
      %v853 = vshrl.u32 %v852, 7
      %v854 = vsub.s32 4, %v853
      %v855 = vrot.slane %v835, %v854
      %v856 = vlaneseq
      %v857 = vshrl.u32 %v856, 7
      %v858 = vsub.s32 5, %v857
      %v859 = vrot.slane %v835, %v858
      %v860 = vlaneseq
      %v861 = vshrl.u32 %v860, 7
      %v862 = vsub.s32 6, %v861
      %v863 = vrot.slane %v835, %v862
      %v864 = vlaneseq
      %v865 = vshrl.u32 %v864, 7
      %v866 = vsub.s32 7, %v865
      %v867 = vrot.slane %v835, %v866
      %vm868 = vcmp.eq.s32.totalorder %v839, 1
      %vm869 = vcmp.eq.s32.totalorder %v843, 1
      %vm870 = vcmp.eq.s32.totalorder %v847, 1
      %vm871 = vcmp.eq.s32.totalorder %v851, 1
      %vm872 = vcmp.eq.s32.totalorder %v855, 1
      %vm873 = vcmp.eq.s32.totalorder %v859, 1
      %vm874 = vcmp.eq.s32.totalorder %v863, 1
      %vm875 = vcmp.eq.s32.totalorder %v867, 1
      %vm876 = vmor %vm831, %vm868
      %vm877 = vmor %vm831, %vm869
      %vm878 = vmor %vm831, %vm870
      %vm879 = vmor %vm831, %vm871
      %vm880 = vmor %vm831, %vm872
      %vm881 = vmor %vm831, %vm873
      %vm882 = vmor %vm831, %vm874
      %vm883 = vmor %vm831, %vm875
      %vm884 = vmor %vm832, %vm868
      %vm885 = vmor %vm832, %vm869
      %vm886 = vmor %vm832, %vm870
      %vm887 = vmor %vm832, %vm871
      %vm888 = vmor %vm832, %vm872
      %vm889 = vmor %vm832, %vm873
      %vm890 = vmor %vm832, %vm874
      %vm891 = vmor %vm832, %vm875
      %vm892 = vmor %vm833, %vm868
      %vm893 = vmor %vm833, %vm869
      %vm894 = vmor %vm833, %vm870
      %vm895 = vmor %vm833, %vm871
      %vm896 = vmor %vm833, %vm872
      %vm897 = vmor %vm833, %vm873
      %vm898 = vmor %vm833, %vm874
      %vm899 = vmor %vm833, %vm875
      %vm900 = vmor %vm834, %vm868
      %vm901 = vmor %vm834, %vm869
      %vm902 = vmor %vm834, %vm870
      %vm903 = vmor %vm834, %vm871
      %vm904 = vmor %vm834, %vm872
      %vm905 = vmor %vm834, %vm873
      %vm906 = vmor %vm834, %vm874
      %vm907 = vmor %vm834, %vm875
      %vm908 = vmand %vm790, %vm876
      %vm909 = vmand %vm791, %vm877
      %vm910 = vmand %vm792, %vm878
      %vm911 = vmand %vm793, %vm879
      %vm912 = vmand %vm794, %vm880
      %vm913 = vmand %vm795, %vm881
      %vm914 = vmand %vm796, %vm882
      %vm915 = vmand %vm797, %vm883
      %vm916 = vmand %vm798, %vm884
      %vm917 = vmand %vm799, %vm885
      %vm918 = vmand %vm800, %vm886
      %vm919 = vmand %vm801, %vm887
      %vm920 = vmand %vm802, %vm888
      %vm921 = vmand %vm803, %vm889
      %vm922 = vmand %vm804, %vm890
      %vm923 = vmand %vm805, %vm891
      %vm924 = vmand %vm806, %vm892
      %vm925 = vmand %vm807, %vm893
      %vm926 = vmand %vm808, %vm894
      %vm927 = vmand %vm809, %vm895
      %vm928 = vmand %vm810, %vm896
      %vm929 = vmand %vm811, %vm897
      %vm930 = vmand %vm812, %vm898
      %vm931 = vmand %vm813, %vm899
      %vm932 = vmand %vm814, %vm900
      %vm933 = vmand %vm815, %vm901
      %vm934 = vmand %vm816, %vm902
      %vm935 = vmand %vm817, %vm903
      %vm936 = vmand %vm818, %vm904
      %vm937 = vmand %vm819, %vm905
      %vm938 = vmand %vm820, %vm906
      %vm939 = vmand %vm821, %vm907
      %v940 = vsel %vm908, 1, 0
      %v941 = vsel %vm909, 1, 0
      %v942 = vsel %vm910, 1, 0
      %v943 = vsel %vm911, 1, 0
      %v944 = vsel %vm912, 1, 0
      %v945 = vsel %vm913, 1, 0
      %v946 = vsel %vm914, 1, 0
      %v947 = vsel %vm915, 1, 0
      %v948 = vsel %vm916, 1, 0
      %v949 = vsel %vm917, 1, 0
      %v950 = vsel %vm918, 1, 0
      %v951 = vsel %vm919, 1, 0
      %v952 = vsel %vm920, 1, 0
      %v953 = vsel %vm921, 1, 0
      %v954 = vsel %vm922, 1, 0
      %v955 = vsel %vm923, 1, 0
      %v956 = vsel %vm924, 1, 0
      %v957 = vsel %vm925, 1, 0
      %v958 = vsel %vm926, 1, 0
      %v959 = vsel %vm927, 1, 0
      %v960 = vsel %vm928, 1, 0
      %v961 = vsel %vm929, 1, 0
      %v962 = vsel %vm930, 1, 0
      %v963 = vsel %vm931, 1, 0
      %v964 = vsel %vm932, 1, 0
      %v965 = vsel %vm933, 1, 0
      %v966 = vsel %vm934, 1, 0
      %v967 = vsel %vm935, 1, 0
      %v968 = vsel %vm936, 1, 0
      %v969 = vsel %vm937, 1, 0
      %v970 = vsel %vm938, 1, 0
      %v971 = vsel %vm939, 1, 0
      %v972 = vcvt.s32.f32 %v940
      %v973 = vcvt.s32.f32 %v941
      %v974 = vcvt.s32.f32 %v942
      %v975 = vcvt.s32.f32 %v943
      %v976 = vcvt.s32.f32 %v944
      %v977 = vcvt.s32.f32 %v945
      %v978 = vcvt.s32.f32 %v946
      %v979 = vcvt.s32.f32 %v947
      %v980 = vcvt.s32.f32 %v948
      %v981 = vcvt.s32.f32 %v949
      %v982 = vcvt.s32.f32 %v950
      %v983 = vcvt.s32.f32 %v951
      %v984 = vcvt.s32.f32 %v952
      %v985 = vcvt.s32.f32 %v953
      %v986 = vcvt.s32.f32 %v954
      %v987 = vcvt.s32.f32 %v955
      %v988 = vcvt.s32.f32 %v956
      %v989 = vcvt.s32.f32 %v957
      %v990 = vcvt.s32.f32 %v958
      %v991 = vcvt.s32.f32 %v959
      %v992 = vcvt.s32.f32 %v960
      %v993 = vcvt.s32.f32 %v961
      %v994 = vcvt.s32.f32 %v962
      %v995 = vcvt.s32.f32 %v963
      %v996 = vcvt.s32.f32 %v964
      %v997 = vcvt.s32.f32 %v965
      %v998 = vcvt.s32.f32 %v966
      %v999 = vcvt.s32.f32 %v967
      %v1000 = vcvt.s32.f32 %v968
      %v1001 = vcvt.s32.f32 %v969
      %v1002 = vcvt.s32.f32 %v970
      %v1003 = vcvt.s32.f32 %v971
      %v1004 = vmul.f32 %v341, %v972
      %v1005 = vmul.f32 %v343, %v973
      %v1006 = vmul.f32 %v430, %v974
      %v1007 = vmul.f32 %v432, %v975
      %v1008 = vmul.f32 %v519, %v976
      %v1009 = vmul.f32 %v521, %v977
      %v1010 = vmul.f32 %v608, %v978
      %v1011 = vmul.f32 %v610, %v979
      %v1012 = vmul.f32 %v347, %v980
      %v1013 = vmul.f32 %v349, %v981
      %v1014 = vmul.f32 %v436, %v982
      %v1015 = vmul.f32 %v438, %v983
      %v1016 = vmul.f32 %v525, %v984
      %v1017 = vmul.f32 %v527, %v985
      %v1018 = vmul.f32 %v614, %v986
      %v1019 = vmul.f32 %v616, %v987
      %v1020 = vmul.f32 %v353, %v988
      %v1021 = vmul.f32 %v355, %v989
      %v1022 = vmul.f32 %v442, %v990
      %v1023 = vmul.f32 %v444, %v991
      %v1024 = vmul.f32 %v531, %v992
      %v1025 = vmul.f32 %v533, %v993
      %v1026 = vmul.f32 %v620, %v994
      %v1027 = vmul.f32 %v622, %v995
      %v1028 = vmul.f32 %v359, %v996
      %v1029 = vmul.f32 %v361, %v997
      %v1030 = vmul.f32 %v448, %v998
      %v1031 = vmul.f32 %v450, %v999
      %v1032 = vmul.f32 %v537, %v1000
      %v1033 = vmul.f32 %v539, %v1001
      %v1034 = vmul.f32 %v626, %v1002
      %v1035 = vmul.f32 %v628, %v1003
      %v1036 = vadd.f32 %v1004, %v1005
      %v1037 = vadd.f32 %v1036, %v1006
      %v1038 = vadd.f32 %v1037, %v1007
      %v1039 = vadd.f32 %v1038, %v1008
      %v1040 = vadd.f32 %v1039, %v1009
      %v1041 = vadd.f32 %v1040, %v1010
      %v1042 = vadd.f32 %v1041, %v1011
      %v1043 = vadd.f32 %v1042, %v1012
      %v1044 = vadd.f32 %v1043, %v1013
      %v1045 = vadd.f32 %v1044, %v1014
      %v1046 = vadd.f32 %v1045, %v1015
      %v1047 = vadd.f32 %v1046, %v1016
      %v1048 = vadd.f32 %v1047, %v1017
      %v1049 = vadd.f32 %v1048, %v1018
      %v1050 = vadd.f32 %v1049, %v1019
      %v1051 = vadd.f32 %v1050, %v1020
      %v1052 = vadd.f32 %v1051, %v1021
      %v1053 = vadd.f32 %v1052, %v1022
      %v1054 = vadd.f32 %v1053, %v1023
      %v1055 = vadd.f32 %v1054, %v1024
      %v1056 = vadd.f32 %v1055, %v1025
      %v1057 = vadd.f32 %v1056, %v1026
      %v1058 = vadd.f32 %v1057, %v1027
      %v1059 = vadd.f32 %v1058, %v1028
      %v1060 = vadd.f32 %v1059, %v1029
      %v1061 = vadd.f32 %v1060, %v1030
      %v1062 = vadd.f32 %v1061, %v1031
      %v1063 = vadd.f32 %v1062, %v1032
      %v1064 = vadd.f32 %v1063, %v1033
      %v1065 = vadd.f32 %v1064, %v1034
      %v1066 = vadd.f32 %v1065, %v1035
      %1067 = vadd.xlane.f32.xlu0 %v1066
      %v1068 = vpop.xlane.xlu0 %1067
      %v1069 = vrot.slane %v1068, 4
      %v1070 = vadd.f32 %v1068, %v1069
      %v1071 = vrot.slane %v1070, 2
      %v1072 = vadd.f32 %v1070, %v1071
      %v1073 = vrot.slane %v1072, 1
      %v1074 = vadd.f32 %v1072, %v1073
      %s1075 = vtos %v1074
      %s1076 = smul.f32 %s1075, 3.359312e-05
      %v1077 = vstv %s1076
      %v1078 = vsub.f32 %v341, %v1077
      %v1079 = vsub.f32 %v343, %v1077
      %v1080 = vsub.f32 %v430, %v1077
      %v1081 = vsub.f32 %v432, %v1077
      %v1082 = vsub.f32 %v519, %v1077
      %v1083 = vsub.f32 %v521, %v1077
      %v1084 = vsub.f32 %v608, %v1077
      %v1085 = vsub.f32 %v610, %v1077
      %v1086 = vsub.f32 %v347, %v1077
      %v1087 = vsub.f32 %v349, %v1077
      %v1088 = vsub.f32 %v436, %v1077
      %v1089 = vsub.f32 %v438, %v1077
      %v1090 = vsub.f32 %v525, %v1077
      %v1091 = vsub.f32 %v527, %v1077
      %v1092 = vsub.f32 %v614, %v1077
      %v1093 = vsub.f32 %v616, %v1077
      %v1094 = vsub.f32 %v353, %v1077
      %v1095 = vsub.f32 %v355, %v1077
      %v1096 = vsub.f32 %v442, %v1077
      %v1097 = vsub.f32 %v444, %v1077
      %v1098 = vsub.f32 %v531, %v1077
      %v1099 = vsub.f32 %v533, %v1077
      %v1100 = vsub.f32 %v620, %v1077
      %v1101 = vsub.f32 %v622, %v1077
      %v1102 = vsub.f32 %v359, %v1077
      %v1103 = vsub.f32 %v361, %v1077
      %v1104 = vsub.f32 %v448, %v1077
      %v1105 = vsub.f32 %v450, %v1077
      %v1106 = vsub.f32 %v537, %v1077
      %v1107 = vsub.f32 %v539, %v1077
      %v1108 = vsub.f32 %v626, %v1077
      %v1109 = vsub.f32 %v628, %v1077
      %v1110 = vmul.f32 %v1078, %v972
      %v1111 = vmul.f32 %v1079, %v973
      %v1112 = vmul.f32 %v1080, %v974
      %v1113 = vmul.f32 %v1081, %v975
      %v1114 = vmul.f32 %v1082, %v976
      %v1115 = vmul.f32 %v1083, %v977
      %v1116 = vmul.f32 %v1084, %v978
      %v1117 = vmul.f32 %v1085, %v979
      %v1118 = vmul.f32 %v1086, %v980
      %v1119 = vmul.f32 %v1087, %v981
      %v1120 = vmul.f32 %v1088, %v982
      %v1121 = vmul.f32 %v1089, %v983
      %v1122 = vmul.f32 %v1090, %v984
      %v1123 = vmul.f32 %v1091, %v985
      %v1124 = vmul.f32 %v1092, %v986
      %v1125 = vmul.f32 %v1093, %v987
      %v1126 = vmul.f32 %v1094, %v988
      %v1127 = vmul.f32 %v1095, %v989
      %v1128 = vmul.f32 %v1096, %v990
      %v1129 = vmul.f32 %v1097, %v991
      %v1130 = vmul.f32 %v1098, %v992
      %v1131 = vmul.f32 %v1099, %v993
      %v1132 = vmul.f32 %v1100, %v994
      %v1133 = vmul.f32 %v1101, %v995
      %v1134 = vmul.f32 %v1102, %v996
      %v1135 = vmul.f32 %v1103, %v997
      %v1136 = vmul.f32 %v1104, %v998
      %v1137 = vmul.f32 %v1105, %v999
      %v1138 = vmul.f32 %v1106, %v1000
      %v1139 = vmul.f32 %v1107, %v1001
      %v1140 = vmul.f32 %v1108, %v1002
      %v1141 = vmul.f32 %v1109, %v1003
      %v1142 = vmul.f32 %v1110, %v1110
      %v1143 = vmul.f32 %v1111, %v1111
      %v1144 = vmul.f32 %v1112, %v1112
      %v1145 = vmul.f32 %v1113, %v1113
      %v1146 = vmul.f32 %v1114, %v1114
      %v1147 = vmul.f32 %v1115, %v1115
      %v1148 = vmul.f32 %v1116, %v1116
      %v1149 = vmul.f32 %v1117, %v1117
      %v1150 = vmul.f32 %v1118, %v1118
      %v1151 = vmul.f32 %v1119, %v1119
      %v1152 = vmul.f32 %v1120, %v1120
      %v1153 = vmul.f32 %v1121, %v1121
      %v1154 = vmul.f32 %v1122, %v1122
      %v1155 = vmul.f32 %v1123, %v1123
      %v1156 = vmul.f32 %v1124, %v1124
      %v1157 = vmul.f32 %v1125, %v1125
      %v1158 = vmul.f32 %v1126, %v1126
      %v1159 = vmul.f32 %v1127, %v1127
      %v1160 = vmul.f32 %v1128, %v1128
      %v1161 = vmul.f32 %v1129, %v1129
      %v1162 = vmul.f32 %v1130, %v1130
      %v1163 = vmul.f32 %v1131, %v1131
      %v1164 = vmul.f32 %v1132, %v1132
      %v1165 = vmul.f32 %v1133, %v1133
      %v1166 = vmul.f32 %v1134, %v1134
      %v1167 = vmul.f32 %v1135, %v1135
      %v1168 = vmul.f32 %v1136, %v1136
      %v1169 = vmul.f32 %v1137, %v1137
      %v1170 = vmul.f32 %v1138, %v1138
      %v1171 = vmul.f32 %v1139, %v1139
      %v1172 = vmul.f32 %v1140, %v1140
      %v1173 = vmul.f32 %v1141, %v1141
      %v1174 = vadd.f32 %v1142, %v1143
      %v1175 = vadd.f32 %v1174, %v1144
      %v1176 = vadd.f32 %v1175, %v1145
      %v1177 = vadd.f32 %v1176, %v1146
      %v1178 = vadd.f32 %v1177, %v1147
      %v1179 = vadd.f32 %v1178, %v1148
      %v1180 = vadd.f32 %v1179, %v1149
      %v1181 = vadd.f32 %v1180, %v1150
      %v1182 = vadd.f32 %v1181, %v1151
      %v1183 = vadd.f32 %v1182, %v1152
      %v1184 = vadd.f32 %v1183, %v1153
      %v1185 = vadd.f32 %v1184, %v1154
      %v1186 = vadd.f32 %v1185, %v1155
      %v1187 = vadd.f32 %v1186, %v1156
      %v1188 = vadd.f32 %v1187, %v1157
      %v1189 = vadd.f32 %v1188, %v1158
      %v1190 = vadd.f32 %v1189, %v1159
      %v1191 = vadd.f32 %v1190, %v1160
      %v1192 = vadd.f32 %v1191, %v1161
      %v1193 = vadd.f32 %v1192, %v1162
      %v1194 = vadd.f32 %v1193, %v1163
      %v1195 = vadd.f32 %v1194, %v1164
      %v1196 = vadd.f32 %v1195, %v1165
      %v1197 = vadd.f32 %v1196, %v1166
      %v1198 = vadd.f32 %v1197, %v1167
      %v1199 = vadd.f32 %v1198, %v1168
      %v1200 = vadd.f32 %v1199, %v1169
      %v1201 = vadd.f32 %v1200, %v1170
      %v1202 = vadd.f32 %v1201, %v1171
      %v1203 = vadd.f32 %v1202, %v1172
      %v1204 = vadd.f32 %v1203, %v1173
      %1205 = vadd.xlane.f32.xlu0 %v1204
      %v1206 = vpop.xlane.xlu0 %1205
      %v1207 = vrot.slane %v1206, 4
      %v1208 = vadd.f32 %v1206, %v1207
      %v1209 = vrot.slane %v1208, 2
      %v1210 = vadd.f32 %v1208, %v1209
      %v1211 = vrot.slane %v1210, 1
      %v1212 = vadd.f32 %v1210, %v1211
      %s1213 = vtos %v1212
      %s1214 = smul.f32 %s1213, 3.359312e-05
      %v1215 = vstv %s1214
      %v1216 = vadd.f32 %v1215, 1e-05
      %v1217 = vrsqrt.pop %v1216
      %v1218 = vld [vmem:[%s3] sm:$0xff]
      %v1219 = vld [vmem:[%s3 + $0x8] sm:$0xff]
      %v1220 = vld [vmem:[%s3 + $0x10] sm:$0xff]
      %v1221 = vld [vmem:[%s3 + $0x18] sm:$0xff]
      %v1222 = vmul.f32 %v1218, %v1217
      %v1223 = vmul.f32 %v1219, %v1217
      %v1224 = vmul.f32 %v1220, %v1217
      %v1225 = vmul.f32 %v1221, %v1217
      %v1226 = vld [vmem:[%s4] sm:$0xff]
      %v1227 = vld [vmem:[%s4 + $0x8] sm:$0xff]
      %v1228 = vld [vmem:[%s4 + $0x10] sm:$0xff]
      %v1229 = vld [vmem:[%s4 + $0x18] sm:$0xff]
      %v1230 = vmul.f32 %v1077, %v1222
      %v1231 = vmul.f32 %v1077, %v1223
      %v1232 = vmul.f32 %v1077, %v1224
      %v1233 = vmul.f32 %v1077, %v1225
      %v1234 = vsub.f32 %v1226, %v1230
      %v1235 = vsub.f32 %v1227, %v1231
      %v1236 = vsub.f32 %v1228, %v1232
      %v1237 = vsub.f32 %v1229, %v1233
      %1239 = vset.pattern.permute.xlu0 0
      %1240 = vperm.xlu0 %1239, %v1222
      %v1241 = vpop.permute.xlu0 %1240
      %1244 = vset.pattern.permute.xlu0 0
      %1245 = vperm.xlu0 %1244, %v1223
      %v1246 = vpop.permute.xlu0 %1245
      %1249 = vset.pattern.permute.xlu0 0
      %1250 = vperm.xlu0 %1249, %v1224
      %v1251 = vpop.permute.xlu0 %1250
      %1254 = vset.pattern.permute.xlu0 0
      %1255 = vperm.xlu0 %1254, %v1225
      %v1256 = vpop.permute.xlu0 %1255
      %v1258 = vmul.f32 %v341, %v1241
      %v1259 = vmul.f32 %v343, %v1241
      %v1260 = vmul.f32 %v430, %v1241
      %v1261 = vmul.f32 %v432, %v1241
      %v1262 = vmul.f32 %v519, %v1241
      %v1263 = vmul.f32 %v521, %v1241
      %v1264 = vmul.f32 %v608, %v1241
      %v1265 = vmul.f32 %v610, %v1241
      %v1266 = vmul.f32 %v347, %v1246
      %v1267 = vmul.f32 %v349, %v1246
      %v1268 = vmul.f32 %v436, %v1246
      %v1269 = vmul.f32 %v438, %v1246
      %v1270 = vmul.f32 %v525, %v1246
      %v1271 = vmul.f32 %v527, %v1246
      %v1272 = vmul.f32 %v614, %v1246
      %v1273 = vmul.f32 %v616, %v1246
      %v1274 = vmul.f32 %v353, %v1251
      %v1275 = vmul.f32 %v355, %v1251
      %v1276 = vmul.f32 %v442, %v1251
      %v1277 = vmul.f32 %v444, %v1251
      %v1278 = vmul.f32 %v531, %v1251
      %v1279 = vmul.f32 %v533, %v1251
      %v1280 = vmul.f32 %v620, %v1251
      %v1281 = vmul.f32 %v622, %v1251
      %v1282 = vmul.f32 %v359, %v1256
      %v1283 = vmul.f32 %v361, %v1256
      %v1284 = vmul.f32 %v448, %v1256
      %v1285 = vmul.f32 %v450, %v1256
      %v1286 = vmul.f32 %v537, %v1256
      %v1287 = vmul.f32 %v539, %v1256
      %v1288 = vmul.f32 %v626, %v1256
      %v1289 = vmul.f32 %v628, %v1256
      %1291 = vset.pattern.permute.xlu0 0
      %1292 = vperm.xlu0 %1291, %v1234
      %v1293 = vpop.permute.xlu0 %1292
      %1296 = vset.pattern.permute.xlu0 0
      %1297 = vperm.xlu0 %1296, %v1235
      %v1298 = vpop.permute.xlu0 %1297
      %1301 = vset.pattern.permute.xlu0 0
      %1302 = vperm.xlu0 %1301, %v1236
      %v1303 = vpop.permute.xlu0 %1302
      %1306 = vset.pattern.permute.xlu0 0
      %1307 = vperm.xlu0 %1306, %v1237
      %v1308 = vpop.permute.xlu0 %1307
      %v1310 = vadd.f32 %v1258, %v1293
      %v1311 = vadd.f32 %v1259, %v1293
      %v1312 = vadd.f32 %v1260, %v1293
      %v1313 = vadd.f32 %v1261, %v1293
      %v1314 = vadd.f32 %v1262, %v1293
      %v1315 = vadd.f32 %v1263, %v1293
      %v1316 = vadd.f32 %v1264, %v1293
      %v1317 = vadd.f32 %v1265, %v1293
      %v1318 = vadd.f32 %v1266, %v1298
      %v1319 = vadd.f32 %v1267, %v1298
      %v1320 = vadd.f32 %v1268, %v1298
      %v1321 = vadd.f32 %v1269, %v1298
      %v1322 = vadd.f32 %v1270, %v1298
      %v1323 = vadd.f32 %v1271, %v1298
      %v1324 = vadd.f32 %v1272, %v1298
      %v1325 = vadd.f32 %v1273, %v1298
      %v1326 = vadd.f32 %v1274, %v1303
      %v1327 = vadd.f32 %v1275, %v1303
      %v1328 = vadd.f32 %v1276, %v1303
      %v1329 = vadd.f32 %v1277, %v1303
      %v1330 = vadd.f32 %v1278, %v1303
      %v1331 = vadd.f32 %v1279, %v1303
      %v1332 = vadd.f32 %v1280, %v1303
      %v1333 = vadd.f32 %v1281, %v1303
      %v1334 = vadd.f32 %v1282, %v1308
      %v1335 = vadd.f32 %v1283, %v1308
      %v1336 = vadd.f32 %v1284, %v1308
      %v1337 = vadd.f32 %v1285, %v1308
      %v1338 = vadd.f32 %v1286, %v1308
      %v1339 = vadd.f32 %v1287, %v1308
      %v1340 = vadd.f32 %v1288, %v1308
      %v1341 = vadd.f32 %v1289, %v1308
      %1342 = vst [vmem:[%s224] sm:$0xff] %v1310
      %1343 = vst [vmem:[%s224 + $0x8] sm:$0xff] %v1311
      %1344 = vst [vmem:[%s224 + $0x10] sm:$0xff] %v1312
      %1345 = vst [vmem:[%s224 + $0x18] sm:$0xff] %v1313
      %1346 = vst [vmem:[%s224 + $0x20] sm:$0xff] %v1314
      %1347 = vst [vmem:[%s224 + $0x28] sm:$0xff] %v1315
      %1348 = vst [vmem:[%s224 + $0x30] sm:$0xff] %v1316
      %1349 = vst [vmem:[%s224 + $0x38] sm:$0xff] %v1317
      %1350 = vst [vmem:[%s224 + $0x40] sm:$0xff] %v1318
      %1351 = vst [vmem:[%s224 + $0x48] sm:$0xff] %v1319
      %1352 = vst [vmem:[%s224 + $0x50] sm:$0xff] %v1320
      %1353 = vst [vmem:[%s224 + $0x58] sm:$0xff] %v1321
      %1354 = vst [vmem:[%s224 + $0x60] sm:$0xff] %v1322
      %1355 = vst [vmem:[%s224 + $0x68] sm:$0xff] %v1323
      %1356 = vst [vmem:[%s224 + $0x70] sm:$0xff] %v1324
      %1357 = vst [vmem:[%s224 + $0x78] sm:$0xff] %v1325
      %1358 = vst [vmem:[%s224 + $0x80] sm:$0xff] %v1326
      %1359 = vst [vmem:[%s224 + $0x88] sm:$0xff] %v1327
      %1360 = vst [vmem:[%s224 + $0x90] sm:$0xff] %v1328
      %1361 = vst [vmem:[%s224 + $0x98] sm:$0xff] %v1329
      %1362 = vst [vmem:[%s224 + $0xa0] sm:$0xff] %v1330
      %1363 = vst [vmem:[%s224 + $0xa8] sm:$0xff] %v1331
      %1364 = vst [vmem:[%s224 + $0xb0] sm:$0xff] %v1332
      %1365 = vst [vmem:[%s224 + $0xb8] sm:$0xff] %v1333
      %1366 = vst [vmem:[%s224 + $0xc0] sm:$0xff] %v1334
      %1367 = vst [vmem:[%s224 + $0xc8] sm:$0xff] %v1335
      %1368 = vst [vmem:[%s224 + $0xd0] sm:$0xff] %v1336
      %1369 = vst [vmem:[%s224 + $0xd8] sm:$0xff] %v1337
      %1370 = vst [vmem:[%s224 + $0xe0] sm:$0xff] %v1338
      %1371 = vst [vmem:[%s224 + $0xe8] sm:$0xff] %v1339
      %1372 = vst [vmem:[%s224 + $0xf0] sm:$0xff] %v1340
      %1373 = vst [vmem:[%s224 + $0xf8] sm:$0xff] %v1341
      %p1374 = scmp.lt.s32.totalorder %s16, 1
      %s1375 = scalar_select %p1374, %s16, 1
      %s1376 = smul.addr %s1375, 32
      %s1377 = smul.addr %s1376, 8
      %s1378 = scalar_lea.vmem %s5, %s1377
      // Predicated region
      $region41: #{transposed_double_conv.3} parent=39 // pred_check
        %p1379 = pneg %p144
      $region42: #{transposed_double_conv.3} parent=39 // pred_check_branch
        %1381 = sbr.rel (%p1379) target = $region44
      $region43: #{transposed_double_conv.3} parent=39 // pred_region
        _
      $region44: #{transposed_double_conv.3} parent=39 // pred_fallthru
        _
    $region40: #{transposed_double_conv.3} parent=5 // pred_fallthru
      _
    %p1382 = scmp.le.s32.totalorder 2, %s11
    // Predicated region
    $region45: #{transposed_double_conv.3} parent=5 // pred_check
      %p1383 = pneg %p1382
    $region46: #{transposed_double_conv.3} parent=5 // pred_check_branch
      %1385 = sbr.rel (%p1383) target = $region48
    $region47: #{transposed_double_conv.3} parent=5 // pred_region
      %s1386 = ssub.s32 %s11, 2
      // Predicated region
      $region49: #{transposed_double_conv.3} parent=47 // pred_check
        %p1387 = pneg %p150
      $region50: #{transposed_double_conv.3} parent=47 // pred_check_branch
        %1389 = sbr.rel (%p1387) target = $region52
      $region51: #{transposed_double_conv.3} parent=47 // pred_region
        %p1390 = scmp.lt.s32.totalorder %s17, 1
        %s1391 = scalar_select %p1390, %s17, 1
        %s1392 = smul.addr %s1391, 32
        %s1393 = smul.addr %s1392, 8
        %s1394 = scalar_lea.vmem %s5, %s1393
      $region52: #{transposed_double_conv.3} parent=47 // pred_fallthru
        _
    $region48: #{transposed_double_conv.3} parent=5 // pred_fallthru
      _
  $region6: #{transposed_double_conv.3} parent=0 // loop_footer
    %s15 = sadd.s32 1, %s11
  $region7: #{transposed_double_conv.3} parent=0 // loop_footer_branch
    %10 = sbr.rel target = $region3
  $region8: #{transposed_double_conv.3} parent=0 // loop_exit
    _

</llo_original>
